<compile_context>
chip_gen: v5e
topology: v5e:2x2
jax: 0.10.0
libtpu: 0.0.40
codegen_flags: <defaults>
</compile_context>

<pallas_src>
import functools

import jax
import jax.numpy as jnp
from jax.experimental import pallas as pl
from jax.experimental.pallas import tpu as pltpu


# ----------------------------------------------------------------------------
# helpers
# ----------------------------------------------------------------------------
def _round_up(x, m):
    return (x + m - 1) // m * m


def _pick_tile(dim, base, cap, prefer=None):
    """Tile <= cap, multiple of `base` (full, base-rounded dim when small).
    When `prefer` is given, try multiples of it first (256-wide N tiles)."""
    if dim <= cap:
        return _round_up(dim, base)
    if prefer is not None:
        t = (cap // prefer) * prefer
        while t >= prefer:
            if dim % t == 0:
                return t
            t -= prefer
    t = cap
    while t >= base:
        if dim % t == 0:
            return t
        t //= 2
    return cap


def _vmem_limit(budget_bytes):
    return int(min(max(2 * budget_bytes + (1 << 20), 4 << 20), 48 << 20))


# ----------------------------------------------------------------------------
# Pallas kernels
# ----------------------------------------------------------------------------
def _matmul_bias_kernel(x_ref, w_ref, b_ref, o_ref, acc_ref):
    """Tiled (x @ w + b): bf16 operands on the MXU, f32 accumulator."""
    k = pl.program_id(2)

    @pl.when(k == 0)
    def _():
        acc_ref[...] = jnp.zeros_like(acc_ref)

    acc_ref[...] += jnp.dot(x_ref[...], w_ref[...],
                            preferred_element_type=jnp.float32)

    @pl.when(k == pl.num_programs(2) - 1)
    def _():
        o_ref[...] = (acc_ref[...] + b_ref[...]).astype(o_ref.dtype)


def linear(x, w, b, out_dtype=jnp.float32):
    """x: (M, K), w: (K, N) bf16, b: (N,) f32 -> (M, N) out_dtype.

    Operands are padded + cast to bf16 in the wrapper (halves DMA bytes and
    per-tile VMEM); accumulation stays f32 in VMEM scratch."""
    M, K = x.shape
    _, N = w.shape
    tm = _pick_tile(M, 8, 512)
    tk = _pick_tile(K, 128, 1024)
    tn = _pick_tile(N, 128, 512, prefer=256)
    Mp, Kp, Np = _round_up(M, tm), _round_up(K, tk), _round_up(N, tn)
    xp = jnp.pad(x, ((0, Mp - M), (0, Kp - K))).astype(jnp.bfloat16)
    wp = jnp.pad(w, ((0, Kp - K), (0, Np - N))).astype(jnp.bfloat16)
    bp = jnp.pad(b.astype(jnp.float32), (0, Np - N)).reshape(1, Np)

    out_bytes = jnp.dtype(out_dtype).itemsize
    budget = (2 * (tm * tk * 2 + tk * tn * 2)   # double-buffered bf16 inputs
              + 2 * tn * 4                      # bias
              + 2 * tm * tn * out_bytes         # double-buffered output
              + tm * tn * 4)                    # accumulator
    out = pl.pallas_call(
        _matmul_bias_kernel,
        out_shape=jax.ShapeDtypeStruct((Mp, Np), out_dtype),
        grid_spec=pltpu.PrefetchScalarGridSpec(
            num_scalar_prefetch=0,
            grid=(Mp // tm, Np // tn, Kp // tk),
            in_specs=[
                pl.BlockSpec((tm, tk), lambda i, j, k: (i, k)),
                pl.BlockSpec((tk, tn), lambda i, j, k: (k, j)),
                pl.BlockSpec((1, tn), lambda i, j, k: (0, j)),
            ],
            out_specs=pl.BlockSpec((tm, tn), lambda i, j, k: (i, j)),
            scratch_shapes=[pltpu.VMEM((tm, tn), jnp.float32)],
        ),
        compiler_params=pltpu.CompilerParams(
            dimension_semantics=("parallel", "parallel", "arbitrary"),
            vmem_limit_bytes=_vmem_limit(budget)),
    )(xp, wp, bp)
    return out[:M, :N]


def _gru_chunk_kernel(x_ref, h0_ref, wih_ref, bih_ref, whh_ref, bhn_ref,
                      hseq_ref, h_scr, gi_scr, *, steps, batch, unroll):
    """One time-chunk of the GRU.

    x_ref:    (steps*batch, E_pad) bf16 streamed chunk of inputs.
    h_scr:    (batch, H) f32 hidden state carried across grid steps.
    gi_scr:   (steps*batch, 3H) f32 fused input projection for this chunk.
    Gate order is PyTorch's (r, z, n); b_hr/b_hz are pre-folded into b_ih,
    b_hn stays inside r*(...)."""
    H = h_scr.shape[-1]
    B = batch

    @pl.when(pl.program_id(0) == 0)
    def _():
        h_scr[...] = h0_ref[...]

    # Fused chunk-level input projection: one big bf16 MXU matmul, so gi
    # never round-trips HBM and is off the sequential critical path.
    gi_scr[...] = jnp.dot(x_ref[...], wih_ref[...],
                          preferred_element_type=jnp.float32) + bih_ref[...]

    whh = whh_ref[...]            # resident (H, 3H) bf16
    bhn = bhn_ref[...]            # (1, H) f32

    def step(t, h):
        off = pl.multiple_of(t * B, 8)
        gi = gi_scr[pl.ds(off, B), :]                                # (B, 3H)
        gh = jnp.dot(h.astype(jnp.bfloat16), whh,
                     preferred_element_type=jnp.float32)             # (B, 3H)
        r = jax.nn.sigmoid(gi[:, :H] + gh[:, :H])
        z = jax.nn.sigmoid(gi[:, H:2 * H] + gh[:, H:2 * H])
        n = jnp.tanh(gi[:, 2 * H:] + r * (gh[:, 2 * H:] + bhn))
        h_new = (1.0 - z) * n + z * h
        hseq_ref[pl.ds(off, B), :] = h_new
        return h_new

    h_scr[...] = jax.lax.fori_loop(0, steps, step, h_scr[...], unroll=unroll)


def gru_sequence(x, h0, w_ih, b_ih, w_hh, b_hn):
    """x: (T, B, E) bf16 time-major inputs, h0: (B, H) f32 -> (T, B, H) f32.

    Time axis is chunked by the grid ("arbitrary"); h carried in VMEM scratch
    so only one chunk of x / h_seq is resident (bounds VMEM, overlaps DMA)."""
    T, B, E = x.shape
    H = h0.shape[-1]
    G = 3 * H
    E_pad = w_ih.shape[0]
    if E_pad != E:
        x = jnp.pad(x, ((0, 0), (0, 0), (0, E_pad - E)))

    TC = T if T <= 32 else 32
    T_pad = _round_up(T, TC)
    if T_pad != T:
        x = jnp.pad(x, ((0, T_pad - T), (0, 0), (0, 0)))
    x2d = x.reshape(T_pad * B, E_pad)
    unroll = True if TC <= 16 else 4

    budget = (2 * TC * B * E_pad * 2            # streamed x chunks (bf16)
              + 2 * TC * B * H * 4              # streamed h_seq chunks (f32)
              + 2 * (E_pad * G * 2 + G * 4 + H * G * 2 + H * 4 + B * H * 4)
              + B * H * 4 + TC * B * G * 4)     # scratches
    # TODO(synk): on v7x the two TensorCores could each take half the batch
    # (independent rows) via a "parallel" leading grid axis; not done here.
    h_seq = pl.pallas_call(
        functools.partial(_gru_chunk_kernel, steps=TC, batch=B, unroll=unroll),
        out_shape=jax.ShapeDtypeStruct((T_pad * B, H), jnp.float32),
        grid_spec=pltpu.PrefetchScalarGridSpec(
            num_scalar_prefetch=0,
            grid=(T_pad // TC,),
            in_specs=[
                pl.BlockSpec((TC * B, E_pad), lambda c: (c, 0)),
                pl.BlockSpec((B, H), lambda c: (0, 0)),
                pl.BlockSpec((E_pad, G), lambda c: (0, 0)),
                pl.BlockSpec((1, G), lambda c: (0, 0)),
                pl.BlockSpec((H, G), lambda c: (0, 0)),
                pl.BlockSpec((1, H), lambda c: (0, 0)),
            ],
            out_specs=pl.BlockSpec((TC * B, H), lambda c: (c, 0)),
            scratch_shapes=[
                pltpu.VMEM((B, H), jnp.float32),          # carried h
                pltpu.VMEM((TC * B, G), jnp.float32),     # fused gi chunk
            ],
        ),
        compiler_params=pltpu.CompilerParams(
            dimension_semantics=("arbitrary",),           # sequential carry
            vmem_limit_bytes=_vmem_limit(budget)),
    )(x2d, h0, w_ih, b_ih, w_hh, b_hn)
    return h_seq.reshape(T_pad, B, H)[:T]


# ----------------------------------------------------------------------------
# Parameters + one-time lane-aligned / bf16 preparation
# ----------------------------------------------------------------------------
def init_params(key, subname_vocab, nonname_vocab, emb_dim, decoder_dim,
                type_vocab):
    ks = jax.random.split(key, 12)
    s = 0.1
    return {
        # MltiModel.__init__
        "subname_emb": s * jax.random.normal(ks[0], (subname_vocab, emb_dim), jnp.float32),
        "nonname_emb": s * jax.random.normal(ks[1], (nonname_vocab, emb_dim), jnp.float32),
        # encoder GRU (emb_dim -> decoder_dim)
        "enc_w_ih": s * jax.random.normal(ks[2], (emb_dim, 3 * decoder_dim), jnp.float32),
        "enc_w_hh": s * jax.random.normal(ks[3], (decoder_dim, 3 * decoder_dim), jnp.float32),
        "enc_b_ih": s * jax.random.normal(ks[4], (3 * decoder_dim,), jnp.float32),
        "enc_b_hh": s * jax.random.normal(ks[5], (3 * decoder_dim,), jnp.float32),
        # TypeDecoder(decoder_dim)
        "type_emb": s * jax.random.normal(ks[6], (type_vocab, decoder_dim), jnp.float32),
        "dec_w_ih": s * jax.random.normal(ks[7], (decoder_dim, 3 * decoder_dim), jnp.float32),
        "dec_w_hh": s * jax.random.normal(ks[8], (decoder_dim, 3 * decoder_dim), jnp.float32),
        "dec_b_ih": s * jax.random.normal(ks[9], (3 * decoder_dim,), jnp.float32),
        "dec_b_hh": s * jax.random.normal(ks[10], (3 * decoder_dim,), jnp.float32),
        "out_w": s * jax.random.normal(ks[11], (decoder_dim, type_vocab), jnp.float32),
        "out_b": jnp.zeros((type_vocab,), jnp.float32),
    }


def _pad_gate_cols(w, b, H, H_pad):
    """(in, 3H)/(3H,) in PyTorch [r|z|n] order -> each gate zero-padded to a
    lane-aligned H_pad-wide slab: (in, 3*H_pad) and (3, H_pad)."""
    in_dim = w.shape[0]
    wp = jnp.zeros((in_dim, 3, H_pad), jnp.float32).at[:, :, :H].set(
        w.reshape(in_dim, 3, H))
    bp = jnp.zeros((3, H_pad), jnp.float32).at[:, :H].set(b.reshape(3, H))
    return wp.reshape(in_dim, 3 * H_pad), bp


def _prepare_gru(w_ih, b_ih, w_hh, b_hh, H, H_pad):
    in_dim = w_ih.shape[0]
    in_pad = _round_up(in_dim, 128)
    wih, bih = _pad_gate_cols(w_ih, b_ih, H, H_pad)
    whh, bhh = _pad_gate_cols(w_hh, b_hh, H, H_pad)
    wih = jnp.zeros((in_pad, 3 * H_pad), jnp.float32).at[:in_dim].set(wih)
    whh = jnp.zeros((H_pad, 3 * H_pad), jnp.float32).at[:H].set(whh)
    # Fold the r/z hidden biases into the precomputed input-gate bias; b_hn
    # must stay inside r*(...) for exact PyTorch GRU semantics.
    bih_fold = jnp.concatenate([bih[0] + bhh[0], bih[1] + bhh[1], bih[2]])
    return {
        "w_ih": wih.astype(jnp.bfloat16),
        "b_ih": bih_fold.reshape(1, 3 * H_pad),
        "w_hh": whh.astype(jnp.bfloat16),
        "b_hn": bhh[2].reshape(1, H_pad),
    }


def prepare_params(params):
    """One-time (outside the forward) lane-aligned padding + bf16 casts."""
    H = params["enc_w_hh"].shape[0]
    H_pad = _round_up(H, 128)
    V = params["out_w"].shape[1]
    pp = {"H": H, "H_pad": H_pad,
          "subname_emb": params["subname_emb"],
          "nonname_emb": params["nonname_emb"],
          "type_emb": params["type_emb"]}
    for pre, keys in (("enc", ("enc_w_ih", "enc_b_ih", "enc_w_hh", "enc_b_hh")),
                      ("dec", ("dec_w_ih", "dec_b_ih", "dec_w_hh", "dec_b_hh"))):
        g = _prepare_gru(params[keys[0]], params[keys[1]],
                         params[keys[2]], params[keys[3]], H, H_pad)
        for k, v in g.items():
            pp[f"{pre}_{k}"] = v
    pp["out_w"] = (jnp.zeros((H_pad, V), jnp.float32)
                   .at[:H].set(params["out_w"])).astype(jnp.bfloat16)
    pp["out_b"] = params["out_b"].astype(jnp.float32)
    return pp


# ----------------------------------------------------------------------------
# Model forward (glue)
# ----------------------------------------------------------------------------
def encode(pp, tokens, names, subname_indices, infer_name_ids):
    """tokens: (T, B) int32 ids (dense padded stand-in for PackedSequence).
    Returns type_state: (num_infer, H_pad); padded lanes are exactly zero."""
    # TODO(synk): PackedSequence variable-length handling is replaced by a
    # dense padded time-major sequence.
    T, B = tokens.shape
    H_pad = pp["H_pad"]
    B_pad = _round_up(B, 8)

    tok_emb = jnp.take(pp["nonname_emb"], tokens, axis=0)               # (T, B, E)
    name_emb = jnp.take(pp["subname_emb"], names, axis=0).mean(axis=1)  # (Nn, E)
    tok_emb = tok_emb.at[subname_indices[:, 0], subname_indices[:, 1]].set(name_emb)
    tok_emb = jnp.pad(tok_emb, ((0, 0), (0, B_pad - B), (0, 0)))
    tok_emb = tok_emb.astype(jnp.bfloat16)                              # (T, B_pad, E)

    h0 = jnp.zeros((B_pad, H_pad), jnp.float32)
    h_seq = gru_sequence(tok_emb, h0, pp["enc_w_ih"], pp["enc_b_ih"],
                         pp["enc_w_hh"], pp["enc_b_hn"])

    pos = subname_indices[infer_name_ids]                               # (Ni, 2)
    type_state = h_seq[pos[:, 0], pos[:, 1]]                            # (Ni, H_pad)
    return type_state


def type_decoder_forward(pp, type_state, type_seqs):
    """type_state: (N, H_pad); type_seqs: list of 1-D int32 arrays.
    Returns logits (N, L_max, type_vocab)."""
    H_pad = pp["H_pad"]
    V = pp["out_w"].shape[1]
    N = type_state.shape[0]
    N_pad = _round_up(N, 8)
    L = max(int(s.shape[0]) for s in type_seqs)

    # TODO(synk): padded timesteps (token id 0) emit unmasked logits; caller
    # must mask them when computing the loss (packed-sequence semantics).
    padded_tok = jnp.stack(
        [jnp.pad(s, (0, L - s.shape[0])) for s in type_seqs], axis=0)   # (N, L)
    tok_tm = jnp.pad(padded_tok.T, ((0, 0), (0, N_pad - N)))            # (L, N_pad)
    dec_in = jnp.take(pp["type_emb"], tok_tm, axis=0).astype(jnp.bfloat16)

    h0 = jnp.pad(type_state, ((0, N_pad - N), (0, 0)))                  # (N_pad, H_pad)
    dec_h = gru_sequence(dec_in, h0, pp["dec_w_ih"], pp["dec_b_ih"],
                         pp["dec_w_hh"], pp["dec_b_hn"])                # (L, N_pad, H_pad)

    logits = linear(dec_h.reshape(L * N_pad, H_pad), pp["out_w"], pp["out_b"])
    logits = logits.reshape(L, N_pad, V)[:, :N]                         # (L, N, V)
    return jnp.transpose(logits, (1, 0, 2))                             # (N, L, V)


def mlti_forward(pp, tokens, names, subname_indices, infer_name_ids, type_seqs):
    type_state = encode(pp, tokens, names, subname_indices, infer_name_ids)
    return type_decoder_forward(pp, type_state, type_seqs)


# ----------------------------------------------------------------------------
if __name__ == "__main__":
    SUBNAME_VOCAB = 32
    NONNAME_VOCAB = 64
    EMB_DIM = 32
    DECODER_DIM = 32
    TYPE_VOCAB = 16
    T, B = 8, 2
    NUM_NAMES, MAX_SUB = 4, 3
    NUM_INFER = 3

    root = jax.random.PRNGKey(0)
    k_par, k_tok, k_nam, k_inf, k_ts = jax.random.split(root, 5)

    params = init_params(k_par, SUBNAME_VOCAB, NONNAME_VOCAB, EMB_DIM,
                         DECODER_DIM, TYPE_VOCAB)
    pp = prepare_params(params)          # one-time padding + bf16 cast

    tokens = jax.random.randint(k_tok, (T, B), 0, NONNAME_VOCAB, jnp.int32)
    names = jax.random.randint(k_nam, (NUM_NAMES, MAX_SUB), 0, SUBNAME_VOCAB,
                               jnp.int32)
    # distinct (t, b) positions for each name
    subname_indices = jnp.array([[1, 0], [3, 1], [5, 0], [6, 1]], jnp.int32)
    infer_name_ids = jax.random.permutation(k_inf, NUM_NAMES)[:NUM_INFER]
    type_seqs = [
        jax.random.randint(jax.random.fold_in(k_ts, i), (3 + i,), 0,
                           TYPE_VOCAB, jnp.int32)
        for i in range(NUM_INFER)
    ]

    logits = mlti_forward(pp, tokens, names, subname_indices, infer_name_ids,
                          type_seqs)
    logits = jax.block_until_ready(logits)
    assert logits.shape == (NUM_INFER, 5, TYPE_VOCAB), logits.shape
    assert bool(jnp.all(jnp.isfinite(logits)))
    print("KERNEL_OK")
</pallas_src>

<mosaic_0001>
module attributes {stable_mosaic.version = 11 : i64} {
  func.func @_gru_chunk_kernel(%arg0: i32, %arg1: memref<64x128xbf16, #tpu.memory_space<vmem>>, %arg2: memref<8x128xf32, #tpu.memory_space<vmem>>, %arg3: memref<128x384xbf16, #tpu.memory_space<vmem>>, %arg4: memref<1x384xf32, #tpu.memory_space<vmem>>, %arg5: memref<128x384xbf16, #tpu.memory_space<vmem>>, %arg6: memref<1x128xf32, #tpu.memory_space<vmem>>, %arg7: memref<64x128xf32, #tpu.memory_space<vmem>>, %arg8: memref<8x128xf32, #tpu.memory_space<vmem>>, %arg9: memref<64x384xf32, #tpu.memory_space<vmem>>) attributes {dimension_semantics = [#tpu.dimension_semantics<arbitrary>], iteration_bounds = array<i64: 1>, scalar_prefetch = 0 : i64, scratch_operands = 2 : i64, tpu.core_type = #tpu.core_type<tc>, window_params = [{transform_indices = @transform_0, window_bounds = array<i64: 64, 128>}, {pipeline_mode = #tpu.pipeline_mode<synchronous>, transform_indices = @transform_1, window_bounds = array<i64: 8, 128>}, {pipeline_mode = #tpu.pipeline_mode<synchronous>, transform_indices = @transform_2, window_bounds = array<i64: 128, 384>}, {pipeline_mode = #tpu.pipeline_mode<synchronous>, transform_indices = @transform_3, window_bounds = array<i64: 1, 384>}, {pipeline_mode = #tpu.pipeline_mode<synchronous>, transform_indices = @transform_4, window_bounds = array<i64: 128, 384>}, {pipeline_mode = #tpu.pipeline_mode<synchronous>, transform_indices = @transform_5, window_bounds = array<i64: 1, 128>}, {transform_indices = @transform_6, window_bounds = array<i64: 64, 128>}]} {
    %c0_i32 = arith.constant 0 : i32
    %0 = arith.cmpi eq, %arg0, %c0_i32 : i32
    %1 = arith.extui %0 : i1 to i32
    %c0_i32_0 = arith.constant 0 : i32
    %2 = arith.cmpi ne, %1, %c0_i32_0 : i32
    scf.if %2 {
      %c0_73 = arith.constant 0 : index
      %c0_74 = arith.constant 0 : index
      %302 = vector.load %arg2[%c0_73, %c0_74] : memref<8x128xf32, #tpu.memory_space<vmem>>, vector<8x128xf32>
      %c0_75 = arith.constant 0 : index
      %c0_76 = arith.constant 0 : index
      %303 = vector.load %arg8[%c0_75, %c0_76] : memref<8x128xf32, #tpu.memory_space<vmem>>, vector<8x128xf32>
      tpu.vector_store %arg8[%c0_75, %c0_76], %302 {strides = array<i32>} : memref<8x128xf32, #tpu.memory_space<vmem>>, vector<8x128xf32>,
    } else {
    }
    %c0 = arith.constant 0 : index
    %c0_1 = arith.constant 0 : index
    %3 = vector.load %arg1[%c0, %c0_1] : memref<64x128xbf16, #tpu.memory_space<vmem>>, vector<64x128xbf16>
    %c0_2 = arith.constant 0 : index
    %c0_3 = arith.constant 0 : index
    %4 = vector.load %arg3[%c0_2, %c0_3] : memref<128x384xbf16, #tpu.memory_space<vmem>>, vector<128x384xbf16>
    %cst = arith.constant dense<0.000000e+00> : vector<64x384xf32>
    %5 = tpu.matmul %3, %4, %cst {dimension_numbers = #tpu.dot_dimension_numbers<[1], [0], [0], [1], [0, 0, 1, 1], [], []>} : vector<64x128xbf16>, vector<128x384xbf16>, vector<64x384xf32> -> vector<64x384xf32>
    %c0_4 = arith.constant 0 : index
    %c0_5 = arith.constant 0 : index
    %6 = vector.load %arg4[%c0_4, %c0_5] : memref<1x384xf32, #tpu.memory_space<vmem>>, vector<1x384xf32>
    %7 = vector.broadcast %6 : vector<1x384xf32> to vector<64x384xf32>
    %8 = arith.addf %5, %7 : vector<64x384xf32>
    %c0_6 = arith.constant 0 : index
    %c0_7 = arith.constant 0 : index
    %9 = vector.load %arg9[%c0_6, %c0_7] : memref<64x384xf32, #tpu.memory_space<vmem>>, vector<64x384xf32>
    tpu.vector_store %arg9[%c0_6, %c0_7], %8 {strides = array<i32>} : memref<64x384xf32, #tpu.memory_space<vmem>>, vector<64x384xf32>,
    %c0_8 = arith.constant 0 : index
    %c0_9 = arith.constant 0 : index
    %10 = vector.load %arg5[%c0_8, %c0_9] : memref<128x384xbf16, #tpu.memory_space<vmem>>, vector<128x384xbf16>
    %c0_10 = arith.constant 0 : index
    %c0_11 = arith.constant 0 : index
    %11 = vector.load %arg6[%c0_10, %c0_11] : memref<1x128xf32, #tpu.memory_space<vmem>>, vector<1x128xf32>
    %c0_12 = arith.constant 0 : index
    %c0_13 = arith.constant 0 : index
    %12 = vector.load %arg8[%c0_12, %c0_13] : memref<8x128xf32, #tpu.memory_space<vmem>>, vector<8x128xf32>
    %c0_i32_14 = arith.constant 0 : i32
    %c8_i32 = arith.constant 8 : i32
    %13 = arith.muli %c0_i32_14, %c8_i32 : i32
    %14 = tpu.assume_multiple %13, 8 : i32
    %15 = arith.index_cast %14 : i32 to index
    %c0_15 = arith.constant 0 : index
    %16 = vector.load %arg9[%15, %c0_15] : memref<64x384xf32, #tpu.memory_space<vmem>>, vector<8x384xf32>
    %17 = arith.truncf %12 : vector<8x128xf32> to vector<8x128xbf16>
    %cst_16 = arith.constant dense<0.000000e+00> : vector<8x384xf32>
    %18 = tpu.matmul %17, %10, %cst_16 {dimension_numbers = #tpu.dot_dimension_numbers<[1], [0], [0], [1], [0, 0, 1, 1], [], []>} : vector<8x128xbf16>, vector<128x384xbf16>, vector<8x384xf32> -> vector<8x384xf32>
    %19 = vector.extract_strided_slice %16 {offsets = [0, 0], sizes = [8, 128], strides = [1, 1]} : vector<8x384xf32> to vector<8x128xf32>
    %20 = vector.extract_strided_slice %18 {offsets = [0, 0], sizes = [8, 128], strides = [1, 1]} : vector<8x384xf32> to vector<8x128xf32>
    %21 = arith.addf %19, %20 : vector<8x128xf32>
    %22 = arith.negf %21 : vector<8x128xf32>
    %23 = math.exp %22 : vector<8x128xf32>
    %cst_17 = arith.constant 1.000000e+00 : f32
    %24 = vector.broadcast %cst_17 : f32 to vector<8x128xf32>
    %25 = arith.addf %24, %23 : vector<8x128xf32>
    %26 = arith.divf %24, %25 : vector<8x128xf32>
    %27 = vector.extract_strided_slice %16 {offsets = [0, 128], sizes = [8, 128], strides = [1, 1]} : vector<8x384xf32> to vector<8x128xf32>
    %28 = vector.extract_strided_slice %18 {offsets = [0, 128], sizes = [8, 128], strides = [1, 1]} : vector<8x384xf32> to vector<8x128xf32>
    %29 = arith.addf %27, %28 : vector<8x128xf32>
    %30 = arith.negf %29 : vector<8x128xf32>
    %31 = math.exp %30 : vector<8x128xf32>
    %cst_18 = arith.constant 1.000000e+00 : f32
    %32 = vector.broadcast %cst_18 : f32 to vector<8x128xf32>
    %33 = arith.addf %32, %31 : vector<8x128xf32>
    %34 = arith.divf %32, %33 : vector<8x128xf32>
    %35 = vector.extract_strided_slice %16 {offsets = [0, 256], sizes = [8, 128], strides = [1, 1]} : vector<8x384xf32> to vector<8x128xf32>
    %36 = vector.extract_strided_slice %18 {offsets = [0, 256], sizes = [8, 128], strides = [1, 1]} : vector<8x384xf32> to vector<8x128xf32>
    %37 = vector.broadcast %11 : vector<1x128xf32> to vector<8x128xf32>
    %38 = arith.addf %36, %37 : vector<8x128xf32>
    %39 = arith.mulf %26, %38 : vector<8x128xf32>
    %40 = arith.addf %35, %39 : vector<8x128xf32>
    %41 = math.tanh %40 : vector<8x128xf32>
    %cst_19 = arith.constant 1.000000e+00 : f32
    %42 = vector.broadcast %cst_19 : f32 to vector<8x128xf32>
    %43 = arith.subf %42, %34 : vector<8x128xf32>
    %44 = arith.mulf %43, %41 : vector<8x128xf32>
    %45 = arith.mulf %34, %12 : vector<8x128xf32>
    %46 = arith.addf %44, %45 : vector<8x128xf32>
    %47 = arith.index_cast %14 : i32 to index
    %c0_20 = arith.constant 0 : index
    %48 = vector.load %arg7[%47, %c0_20] : memref<64x128xf32, #tpu.memory_space<vmem>>, vector<8x128xf32>
    tpu.vector_store %arg7[%47, %c0_20], %46 {strides = array<i32>} : memref<64x128xf32, #tpu.memory_space<vmem>>, vector<8x128xf32>,
    %c1_i32 = arith.constant 1 : i32
    %c8_i32_21 = arith.constant 8 : i32
    %49 = arith.muli %c1_i32, %c8_i32_21 : i32
    %50 = tpu.assume_multiple %49, 8 : i32
    %51 = arith.index_cast %50 : i32 to index
    %c0_22 = arith.constant 0 : index
    %52 = vector.load %arg9[%51, %c0_22] : memref<64x384xf32, #tpu.memory_space<vmem>>, vector<8x384xf32>
    %53 = arith.truncf %46 : vector<8x128xf32> to vector<8x128xbf16>
    %cst_23 = arith.constant dense<0.000000e+00> : vector<8x384xf32>
    %54 = tpu.matmul %53, %10, %cst_23 {dimension_numbers = #tpu.dot_dimension_numbers<[1], [0], [0], [1], [0, 0, 1, 1], [], []>} : vector<8x128xbf16>, vector<128x384xbf16>, vector<8x384xf32> -> vector<8x384xf32>
    %55 = vector.extract_strided_slice %52 {offsets = [0, 0], sizes = [8, 128], strides = [1, 1]} : vector<8x384xf32> to vector<8x128xf32>
    %56 = vector.extract_strided_slice %54 {offsets = [0, 0], sizes = [8, 128], strides = [1, 1]} : vector<8x384xf32> to vector<8x128xf32>
    %57 = arith.addf %55, %56 : vector<8x128xf32>
    %58 = arith.negf %57 : vector<8x128xf32>
    %59 = math.exp %58 : vector<8x128xf32>
    %cst_24 = arith.constant 1.000000e+00 : f32
    %60 = vector.broadcast %cst_24 : f32 to vector<8x128xf32>
    %61 = arith.addf %60, %59 : vector<8x128xf32>
    %62 = arith.divf %60, %61 : vector<8x128xf32>
    %63 = vector.extract_strided_slice %52 {offsets = [0, 128], sizes = [8, 128], strides = [1, 1]} : vector<8x384xf32> to vector<8x128xf32>
    %64 = vector.extract_strided_slice %54 {offsets = [0, 128], sizes = [8, 128], strides = [1, 1]} : vector<8x384xf32> to vector<8x128xf32>
    %65 = arith.addf %63, %64 : vector<8x128xf32>
    %66 = arith.negf %65 : vector<8x128xf32>
    %67 = math.exp %66 : vector<8x128xf32>
    %cst_25 = arith.constant 1.000000e+00 : f32
    %68 = vector.broadcast %cst_25 : f32 to vector<8x128xf32>
    %69 = arith.addf %68, %67 : vector<8x128xf32>
    %70 = arith.divf %68, %69 : vector<8x128xf32>
    %71 = vector.extract_strided_slice %52 {offsets = [0, 256], sizes = [8, 128], strides = [1, 1]} : vector<8x384xf32> to vector<8x128xf32>
    %72 = vector.extract_strided_slice %54 {offsets = [0, 256], sizes = [8, 128], strides = [1, 1]} : vector<8x384xf32> to vector<8x128xf32>
    %73 = vector.broadcast %11 : vector<1x128xf32> to vector<8x128xf32>
    %74 = arith.addf %72, %73 : vector<8x128xf32>
    %75 = arith.mulf %62, %74 : vector<8x128xf32>
    %76 = arith.addf %71, %75 : vector<8x128xf32>
    %77 = math.tanh %76 : vector<8x128xf32>
    %cst_26 = arith.constant 1.000000e+00 : f32
    %78 = vector.broadcast %cst_26 : f32 to vector<8x128xf32>
    %79 = arith.subf %78, %70 : vector<8x128xf32>
    %80 = arith.mulf %79, %77 : vector<8x128xf32>
    %81 = arith.mulf %70, %46 : vector<8x128xf32>
    %82 = arith.addf %80, %81 : vector<8x128xf32>
    %83 = arith.index_cast %50 : i32 to index
    %c0_27 = arith.constant 0 : index
    %84 = vector.load %arg7[%83, %c0_27] : memref<64x128xf32, #tpu.memory_space<vmem>>, vector<8x128xf32>
    tpu.vector_store %arg7[%83, %c0_27], %82 {strides = array<i32>} : memref<64x128xf32, #tpu.memory_space<vmem>>, vector<8x128xf32>,
    %c2_i32 = arith.constant 2 : i32
    %c8_i32_28 = arith.constant 8 : i32
    %85 = arith.muli %c2_i32, %c8_i32_28 : i32
    %86 = tpu.assume_multiple %85, 8 : i32
    %87 = arith.index_cast %86 : i32 to index
    %c0_29 = arith.constant 0 : index
    %88 = vector.load %arg9[%87, %c0_29] : memref<64x384xf32, #tpu.memory_space<vmem>>, vector<8x384xf32>
    %89 = arith.truncf %82 : vector<8x128xf32> to vector<8x128xbf16>
    %cst_30 = arith.constant dense<0.000000e+00> : vector<8x384xf32>
    %90 = tpu.matmul %89, %10, %cst_30 {dimension_numbers = #tpu.dot_dimension_numbers<[1], [0], [0], [1], [0, 0, 1, 1], [], []>} : vector<8x128xbf16>, vector<128x384xbf16>, vector<8x384xf32> -> vector<8x384xf32>
    %91 = vector.extract_strided_slice %88 {offsets = [0, 0], sizes = [8, 128], strides = [1, 1]} : vector<8x384xf32> to vector<8x128xf32>
    %92 = vector.extract_strided_slice %90 {offsets = [0, 0], sizes = [8, 128], strides = [1, 1]} : vector<8x384xf32> to vector<8x128xf32>
    %93 = arith.addf %91, %92 : vector<8x128xf32>
    %94 = arith.negf %93 : vector<8x128xf32>
    %95 = math.exp %94 : vector<8x128xf32>
    %cst_31 = arith.constant 1.000000e+00 : f32
    %96 = vector.broadcast %cst_31 : f32 to vector<8x128xf32>
    %97 = arith.addf %96, %95 : vector<8x128xf32>
    %98 = arith.divf %96, %97 : vector<8x128xf32>
    %99 = vector.extract_strided_slice %88 {offsets = [0, 128], sizes = [8, 128], strides = [1, 1]} : vector<8x384xf32> to vector<8x128xf32>
    %100 = vector.extract_strided_slice %90 {offsets = [0, 128], sizes = [8, 128], strides = [1, 1]} : vector<8x384xf32> to vector<8x128xf32>
    %101 = arith.addf %99, %100 : vector<8x128xf32>
    %102 = arith.negf %101 : vector<8x128xf32>
    %103 = math.exp %102 : vector<8x128xf32>
    %cst_32 = arith.constant 1.000000e+00 : f32
    %104 = vector.broadcast %cst_32 : f32 to vector<8x128xf32>
    %105 = arith.addf %104, %103 : vector<8x128xf32>
    %106 = arith.divf %104, %105 : vector<8x128xf32>
    %107 = vector.extract_strided_slice %88 {offsets = [0, 256], sizes = [8, 128], strides = [1, 1]} : vector<8x384xf32> to vector<8x128xf32>
    %108 = vector.extract_strided_slice %90 {offsets = [0, 256], sizes = [8, 128], strides = [1, 1]} : vector<8x384xf32> to vector<8x128xf32>
    %109 = vector.broadcast %11 : vector<1x128xf32> to vector<8x128xf32>
    %110 = arith.addf %108, %109 : vector<8x128xf32>
    %111 = arith.mulf %98, %110 : vector<8x128xf32>
    %112 = arith.addf %107, %111 : vector<8x128xf32>
    %113 = math.tanh %112 : vector<8x128xf32>
    %cst_33 = arith.constant 1.000000e+00 : f32
    %114 = vector.broadcast %cst_33 : f32 to vector<8x128xf32>
    %115 = arith.subf %114, %106 : vector<8x128xf32>
    %116 = arith.mulf %115, %113 : vector<8x128xf32>
    %117 = arith.mulf %106, %82 : vector<8x128xf32>
    %118 = arith.addf %116, %117 : vector<8x128xf32>
    %119 = arith.index_cast %86 : i32 to index
    %c0_34 = arith.constant 0 : index
    %120 = vector.load %arg7[%119, %c0_34] : memref<64x128xf32, #tpu.memory_space<vmem>>, vector<8x128xf32>
    tpu.vector_store %arg7[%119, %c0_34], %118 {strides = array<i32>} : memref<64x128xf32, #tpu.memory_space<vmem>>, vector<8x128xf32>,
    %c3_i32 = arith.constant 3 : i32
    %c8_i32_35 = arith.constant 8 : i32
    %121 = arith.muli %c3_i32, %c8_i32_35 : i32
    %122 = tpu.assume_multiple %121, 8 : i32
    %123 = arith.index_cast %122 : i32 to index
    %c0_36 = arith.constant 0 : index
    %124 = vector.load %arg9[%123, %c0_36] : memref<64x384xf32, #tpu.memory_space<vmem>>, vector<8x384xf32>
    %125 = arith.truncf %118 : vector<8x128xf32> to vector<8x128xbf16>
    %cst_37 = arith.constant dense<0.000000e+00> : vector<8x384xf32>
    %126 = tpu.matmul %125, %10, %cst_37 {dimension_numbers = #tpu.dot_dimension_numbers<[1], [0], [0], [1], [0, 0, 1, 1], [], []>} : vector<8x128xbf16>, vector<128x384xbf16>, vector<8x384xf32> -> vector<8x384xf32>
    %127 = vector.extract_strided_slice %124 {offsets = [0, 0], sizes = [8, 128], strides = [1, 1]} : vector<8x384xf32> to vector<8x128xf32>
    %128 = vector.extract_strided_slice %126 {offsets = [0, 0], sizes = [8, 128], strides = [1, 1]} : vector<8x384xf32> to vector<8x128xf32>
    %129 = arith.addf %127, %128 : vector<8x128xf32>
    %130 = arith.negf %129 : vector<8x128xf32>
    %131 = math.exp %130 : vector<8x128xf32>
    %cst_38 = arith.constant 1.000000e+00 : f32
    %132 = vector.broadcast %cst_38 : f32 to vector<8x128xf32>
    %133 = arith.addf %132, %131 : vector<8x128xf32>
    %134 = arith.divf %132, %133 : vector<8x128xf32>
    %135 = vector.extract_strided_slice %124 {offsets = [0, 128], sizes = [8, 128], strides = [1, 1]} : vector<8x384xf32> to vector<8x128xf32>
    %136 = vector.extract_strided_slice %126 {offsets = [0, 128], sizes = [8, 128], strides = [1, 1]} : vector<8x384xf32> to vector<8x128xf32>
    %137 = arith.addf %135, %136 : vector<8x128xf32>
    %138 = arith.negf %137 : vector<8x128xf32>
    %139 = math.exp %138 : vector<8x128xf32>
    %cst_39 = arith.constant 1.000000e+00 : f32
    %140 = vector.broadcast %cst_39 : f32 to vector<8x128xf32>
    %141 = arith.addf %140, %139 : vector<8x128xf32>
    %142 = arith.divf %140, %141 : vector<8x128xf32>
    %143 = vector.extract_strided_slice %124 {offsets = [0, 256], sizes = [8, 128], strides = [1, 1]} : vector<8x384xf32> to vector<8x128xf32>
    %144 = vector.extract_strided_slice %126 {offsets = [0, 256], sizes = [8, 128], strides = [1, 1]} : vector<8x384xf32> to vector<8x128xf32>
    %145 = vector.broadcast %11 : vector<1x128xf32> to vector<8x128xf32>
    %146 = arith.addf %144, %145 : vector<8x128xf32>
    %147 = arith.mulf %134, %146 : vector<8x128xf32>
    %148 = arith.addf %143, %147 : vector<8x128xf32>
    %149 = math.tanh %148 : vector<8x128xf32>
    %cst_40 = arith.constant 1.000000e+00 : f32
    %150 = vector.broadcast %cst_40 : f32 to vector<8x128xf32>
    %151 = arith.subf %150, %142 : vector<8x128xf32>
    %152 = arith.mulf %151, %149 : vector<8x128xf32>
    %153 = arith.mulf %142, %118 : vector<8x128xf32>
    %154 = arith.addf %152, %153 : vector<8x128xf32>
    %155 = arith.index_cast %122 : i32 to index
    %c0_41 = arith.constant 0 : index
    %156 = vector.load %arg7[%155, %c0_41] : memref<64x128xf32, #tpu.memory_space<vmem>>, vector<8x128xf32>
    tpu.vector_store %arg7[%155, %c0_41], %154 {strides = array<i32>} : memref<64x128xf32, #tpu.memory_space<vmem>>, vector<8x128xf32>,
    %c4_i32 = arith.constant 4 : i32
    %c8_i32_42 = arith.constant 8 : i32
    %157 = arith.muli %c4_i32, %c8_i32_42 : i32
    %158 = tpu.assume_multiple %157, 8 : i32
    %159 = arith.index_cast %158 : i32 to index
    %c0_43 = arith.constant 0 : index
    %160 = vector.load %arg9[%159, %c0_43] : memref<64x384xf32, #tpu.memory_space<vmem>>, vector<8x384xf32>
    %161 = arith.truncf %154 : vector<8x128xf32> to vector<8x128xbf16>
    %cst_44 = arith.constant dense<0.000000e+00> : vector<8x384xf32>
    %162 = tpu.matmul %161, %10, %cst_44 {dimension_numbers = #tpu.dot_dimension_numbers<[1], [0], [0], [1], [0, 0, 1, 1], [], []>} : vector<8x128xbf16>, vector<128x384xbf16>, vector<8x384xf32> -> vector<8x384xf32>
    %163 = vector.extract_strided_slice %160 {offsets = [0, 0], sizes = [8, 128], strides = [1, 1]} : vector<8x384xf32> to vector<8x128xf32>
    %164 = vector.extract_strided_slice %162 {offsets = [0, 0], sizes = [8, 128], strides = [1, 1]} : vector<8x384xf32> to vector<8x128xf32>
    %165 = arith.addf %163, %164 : vector<8x128xf32>
    %166 = arith.negf %165 : vector<8x128xf32>
    %167 = math.exp %166 : vector<8x128xf32>
    %cst_45 = arith.constant 1.000000e+00 : f32
    %168 = vector.broadcast %cst_45 : f32 to vector<8x128xf32>
    %169 = arith.addf %168, %167 : vector<8x128xf32>
    %170 = arith.divf %168, %169 : vector<8x128xf32>
    %171 = vector.extract_strided_slice %160 {offsets = [0, 128], sizes = [8, 128], strides = [1, 1]} : vector<8x384xf32> to vector<8x128xf32>
    %172 = vector.extract_strided_slice %162 {offsets = [0, 128], sizes = [8, 128], strides = [1, 1]} : vector<8x384xf32> to vector<8x128xf32>
    %173 = arith.addf %171, %172 : vector<8x128xf32>
    %174 = arith.negf %173 : vector<8x128xf32>
    %175 = math.exp %174 : vector<8x128xf32>
    %cst_46 = arith.constant 1.000000e+00 : f32
    %176 = vector.broadcast %cst_46 : f32 to vector<8x128xf32>
    %177 = arith.addf %176, %175 : vector<8x128xf32>
    %178 = arith.divf %176, %177 : vector<8x128xf32>
    %179 = vector.extract_strided_slice %160 {offsets = [0, 256], sizes = [8, 128], strides = [1, 1]} : vector<8x384xf32> to vector<8x128xf32>
    %180 = vector.extract_strided_slice %162 {offsets = [0, 256], sizes = [8, 128], strides = [1, 1]} : vector<8x384xf32> to vector<8x128xf32>
    %181 = vector.broadcast %11 : vector<1x128xf32> to vector<8x128xf32>
    %182 = arith.addf %180, %181 : vector<8x128xf32>
    %183 = arith.mulf %170, %182 : vector<8x128xf32>
    %184 = arith.addf %179, %183 : vector<8x128xf32>
    %185 = math.tanh %184 : vector<8x128xf32>
    %cst_47 = arith.constant 1.000000e+00 : f32
    %186 = vector.broadcast %cst_47 : f32 to vector<8x128xf32>
    %187 = arith.subf %186, %178 : vector<8x128xf32>
    %188 = arith.mulf %187, %185 : vector<8x128xf32>
    %189 = arith.mulf %178, %154 : vector<8x128xf32>
    %190 = arith.addf %188, %189 : vector<8x128xf32>
    %191 = arith.index_cast %158 : i32 to index
    %c0_48 = arith.constant 0 : index
    %192 = vector.load %arg7[%191, %c0_48] : memref<64x128xf32, #tpu.memory_space<vmem>>, vector<8x128xf32>
    tpu.vector_store %arg7[%191, %c0_48], %190 {strides = array<i32>} : memref<64x128xf32, #tpu.memory_space<vmem>>, vector<8x128xf32>,
    %c5_i32 = arith.constant 5 : i32
    %c8_i32_49 = arith.constant 8 : i32
    %193 = arith.muli %c5_i32, %c8_i32_49 : i32
    %194 = tpu.assume_multiple %193, 8 : i32
    %195 = arith.index_cast %194 : i32 to index
    %c0_50 = arith.constant 0 : index
    %196 = vector.load %arg9[%195, %c0_50] : memref<64x384xf32, #tpu.memory_space<vmem>>, vector<8x384xf32>
    %197 = arith.truncf %190 : vector<8x128xf32> to vector<8x128xbf16>
    %cst_51 = arith.constant dense<0.000000e+00> : vector<8x384xf32>
    %198 = tpu.matmul %197, %10, %cst_51 {dimension_numbers = #tpu.dot_dimension_numbers<[1], [0], [0], [1], [0, 0, 1, 1], [], []>} : vector<8x128xbf16>, vector<128x384xbf16>, vector<8x384xf32> -> vector<8x384xf32>
    %199 = vector.extract_strided_slice %196 {offsets = [0, 0], sizes = [8, 128], strides = [1, 1]} : vector<8x384xf32> to vector<8x128xf32>
    %200 = vector.extract_strided_slice %198 {offsets = [0, 0], sizes = [8, 128], strides = [1, 1]} : vector<8x384xf32> to vector<8x128xf32>
    %201 = arith.addf %199, %200 : vector<8x128xf32>
    %202 = arith.negf %201 : vector<8x128xf32>
    %203 = math.exp %202 : vector<8x128xf32>
    %cst_52 = arith.constant 1.000000e+00 : f32
    %204 = vector.broadcast %cst_52 : f32 to vector<8x128xf32>
    %205 = arith.addf %204, %203 : vector<8x128xf32>
    %206 = arith.divf %204, %205 : vector<8x128xf32>
    %207 = vector.extract_strided_slice %196 {offsets = [0, 128], sizes = [8, 128], strides = [1, 1]} : vector<8x384xf32> to vector<8x128xf32>
    %208 = vector.extract_strided_slice %198 {offsets = [0, 128], sizes = [8, 128], strides = [1, 1]} : vector<8x384xf32> to vector<8x128xf32>
    %209 = arith.addf %207, %208 : vector<8x128xf32>
    %210 = arith.negf %209 : vector<8x128xf32>
    %211 = math.exp %210 : vector<8x128xf32>
    %cst_53 = arith.constant 1.000000e+00 : f32
    %212 = vector.broadcast %cst_53 : f32 to vector<8x128xf32>
    %213 = arith.addf %212, %211 : vector<8x128xf32>
    %214 = arith.divf %212, %213 : vector<8x128xf32>
    %215 = vector.extract_strided_slice %196 {offsets = [0, 256], sizes = [8, 128], strides = [1, 1]} : vector<8x384xf32> to vector<8x128xf32>
    %216 = vector.extract_strided_slice %198 {offsets = [0, 256], sizes = [8, 128], strides = [1, 1]} : vector<8x384xf32> to vector<8x128xf32>
    %217 = vector.broadcast %11 : vector<1x128xf32> to vector<8x128xf32>
    %218 = arith.addf %216, %217 : vector<8x128xf32>
    %219 = arith.mulf %206, %218 : vector<8x128xf32>
    %220 = arith.addf %215, %219 : vector<8x128xf32>
    %221 = math.tanh %220 : vector<8x128xf32>
    %cst_54 = arith.constant 1.000000e+00 : f32
    %222 = vector.broadcast %cst_54 : f32 to vector<8x128xf32>
    %223 = arith.subf %222, %214 : vector<8x128xf32>
    %224 = arith.mulf %223, %221 : vector<8x128xf32>
    %225 = arith.mulf %214, %190 : vector<8x128xf32>
    %226 = arith.addf %224, %225 : vector<8x128xf32>
    %227 = arith.index_cast %194 : i32 to index
    %c0_55 = arith.constant 0 : index
    %228 = vector.load %arg7[%227, %c0_55] : memref<64x128xf32, #tpu.memory_space<vmem>>, vector<8x128xf32>
    tpu.vector_store %arg7[%227, %c0_55], %226 {strides = array<i32>} : memref<64x128xf32, #tpu.memory_space<vmem>>, vector<8x128xf32>,
    %c6_i32 = arith.constant 6 : i32
    %c8_i32_56 = arith.constant 8 : i32
    %229 = arith.muli %c6_i32, %c8_i32_56 : i32
    %230 = tpu.assume_multiple %229, 8 : i32
    %231 = arith.index_cast %230 : i32 to index
    %c0_57 = arith.constant 0 : index
    %232 = vector.load %arg9[%231, %c0_57] : memref<64x384xf32, #tpu.memory_space<vmem>>, vector<8x384xf32>
    %233 = arith.truncf %226 : vector<8x128xf32> to vector<8x128xbf16>
    %cst_58 = arith.constant dense<0.000000e+00> : vector<8x384xf32>
    %234 = tpu.matmul %233, %10, %cst_58 {dimension_numbers = #tpu.dot_dimension_numbers<[1], [0], [0], [1], [0, 0, 1, 1], [], []>} : vector<8x128xbf16>, vector<128x384xbf16>, vector<8x384xf32> -> vector<8x384xf32>
    %235 = vector.extract_strided_slice %232 {offsets = [0, 0], sizes = [8, 128], strides = [1, 1]} : vector<8x384xf32> to vector<8x128xf32>
    %236 = vector.extract_strided_slice %234 {offsets = [0, 0], sizes = [8, 128], strides = [1, 1]} : vector<8x384xf32> to vector<8x128xf32>
    %237 = arith.addf %235, %236 : vector<8x128xf32>
    %238 = arith.negf %237 : vector<8x128xf32>
    %239 = math.exp %238 : vector<8x128xf32>
    %cst_59 = arith.constant 1.000000e+00 : f32
    %240 = vector.broadcast %cst_59 : f32 to vector<8x128xf32>
    %241 = arith.addf %240, %239 : vector<8x128xf32>
    %242 = arith.divf %240, %241 : vector<8x128xf32>
    %243 = vector.extract_strided_slice %232 {offsets = [0, 128], sizes = [8, 128], strides = [1, 1]} : vector<8x384xf32> to vector<8x128xf32>
    %244 = vector.extract_strided_slice %234 {offsets = [0, 128], sizes = [8, 128], strides = [1, 1]} : vector<8x384xf32> to vector<8x128xf32>
    %245 = arith.addf %243, %244 : vector<8x128xf32>
    %246 = arith.negf %245 : vector<8x128xf32>
    %247 = math.exp %246 : vector<8x128xf32>
    %cst_60 = arith.constant 1.000000e+00 : f32
    %248 = vector.broadcast %cst_60 : f32 to vector<8x128xf32>
    %249 = arith.addf %248, %247 : vector<8x128xf32>
    %250 = arith.divf %248, %249 : vector<8x128xf32>
    %251 = vector.extract_strided_slice %232 {offsets = [0, 256], sizes = [8, 128], strides = [1, 1]} : vector<8x384xf32> to vector<8x128xf32>
    %252 = vector.extract_strided_slice %234 {offsets = [0, 256], sizes = [8, 128], strides = [1, 1]} : vector<8x384xf32> to vector<8x128xf32>
    %253 = vector.broadcast %11 : vector<1x128xf32> to vector<8x128xf32>
    %254 = arith.addf %252, %253 : vector<8x128xf32>
    %255 = arith.mulf %242, %254 : vector<8x128xf32>
    %256 = arith.addf %251, %255 : vector<8x128xf32>
    %257 = math.tanh %256 : vector<8x128xf32>
    %cst_61 = arith.constant 1.000000e+00 : f32
    %258 = vector.broadcast %cst_61 : f32 to vector<8x128xf32>
    %259 = arith.subf %258, %250 : vector<8x128xf32>
    %260 = arith.mulf %259, %257 : vector<8x128xf32>
    %261 = arith.mulf %250, %226 : vector<8x128xf32>
    %262 = arith.addf %260, %261 : vector<8x128xf32>
    %263 = arith.index_cast %230 : i32 to index
    %c0_62 = arith.constant 0 : index
    %264 = vector.load %arg7[%263, %c0_62] : memref<64x128xf32, #tpu.memory_space<vmem>>, vector<8x128xf32>
    tpu.vector_store %arg7[%263, %c0_62], %262 {strides = array<i32>} : memref<64x128xf32, #tpu.memory_space<vmem>>, vector<8x128xf32>,
    %c7_i32 = arith.constant 7 : i32
    %c8_i32_63 = arith.constant 8 : i32
    %265 = arith.muli %c7_i32, %c8_i32_63 : i32
    %266 = tpu.assume_multiple %265, 8 : i32
    %267 = arith.index_cast %266 : i32 to index
    %c0_64 = arith.constant 0 : index
    %268 = vector.load %arg9[%267, %c0_64] : memref<64x384xf32, #tpu.memory_space<vmem>>, vector<8x384xf32>
    %269 = arith.truncf %262 : vector<8x128xf32> to vector<8x128xbf16>
    %cst_65 = arith.constant dense<0.000000e+00> : vector<8x384xf32>
    %270 = tpu.matmul %269, %10, %cst_65 {dimension_numbers = #tpu.dot_dimension_numbers<[1], [0], [0], [1], [0, 0, 1, 1], [], []>} : vector<8x128xbf16>, vector<128x384xbf16>, vector<8x384xf32> -> vector<8x384xf32>
    %271 = vector.extract_strided_slice %268 {offsets = [0, 0], sizes = [8, 128], strides = [1, 1]} : vector<8x384xf32> to vector<8x128xf32>
    %272 = vector.extract_strided_slice %270 {offsets = [0, 0], sizes = [8, 128], strides = [1, 1]} : vector<8x384xf32> to vector<8x128xf32>
    %273 = arith.addf %271, %272 : vector<8x128xf32>
    %274 = arith.negf %273 : vector<8x128xf32>
    %275 = math.exp %274 : vector<8x128xf32>
    %cst_66 = arith.constant 1.000000e+00 : f32
    %276 = vector.broadcast %cst_66 : f32 to vector<8x128xf32>
    %277 = arith.addf %276, %275 : vector<8x128xf32>
    %278 = arith.divf %276, %277 : vector<8x128xf32>
    %279 = vector.extract_strided_slice %268 {offsets = [0, 128], sizes = [8, 128], strides = [1, 1]} : vector<8x384xf32> to vector<8x128xf32>
    %280 = vector.extract_strided_slice %270 {offsets = [0, 128], sizes = [8, 128], strides = [1, 1]} : vector<8x384xf32> to vector<8x128xf32>
    %281 = arith.addf %279, %280 : vector<8x128xf32>
    %282 = arith.negf %281 : vector<8x128xf32>
    %283 = math.exp %282 : vector<8x128xf32>
    %cst_67 = arith.constant 1.000000e+00 : f32
    %284 = vector.broadcast %cst_67 : f32 to vector<8x128xf32>
    %285 = arith.addf %284, %283 : vector<8x128xf32>
    %286 = arith.divf %284, %285 : vector<8x128xf32>
    %287 = vector.extract_strided_slice %268 {offsets = [0, 256], sizes = [8, 128], strides = [1, 1]} : vector<8x384xf32> to vector<8x128xf32>
    %288 = vector.extract_strided_slice %270 {offsets = [0, 256], sizes = [8, 128], strides = [1, 1]} : vector<8x384xf32> to vector<8x128xf32>
    %289 = vector.broadcast %11 : vector<1x128xf32> to vector<8x128xf32>
    %290 = arith.addf %288, %289 : vector<8x128xf32>
    %291 = arith.mulf %278, %290 : vector<8x128xf32>
    %292 = arith.addf %287, %291 : vector<8x128xf32>
    %293 = math.tanh %292 : vector<8x128xf32>
    %cst_68 = arith.constant 1.000000e+00 : f32
    %294 = vector.broadcast %cst_68 : f32 to vector<8x128xf32>
    %295 = arith.subf %294, %286 : vector<8x128xf32>
    %296 = arith.mulf %295, %293 : vector<8x128xf32>
    %297 = arith.mulf %286, %262 : vector<8x128xf32>
    %298 = arith.addf %296, %297 : vector<8x128xf32>
    %299 = arith.index_cast %266 : i32 to index
    %c0_69 = arith.constant 0 : index
    %300 = vector.load %arg7[%299, %c0_69] : memref<64x128xf32, #tpu.memory_space<vmem>>, vector<8x128xf32>
    tpu.vector_store %arg7[%299, %c0_69], %298 {strides = array<i32>} : memref<64x128xf32, #tpu.memory_space<vmem>>, vector<8x128xf32>,
    %c8_i32_70 = arith.constant 8 : i32
    %c0_71 = arith.constant 0 : index
    %c0_72 = arith.constant 0 : index
    %301 = vector.load %arg8[%c0_71, %c0_72] : memref<8x128xf32, #tpu.memory_space<vmem>>, vector<8x128xf32>
    tpu.vector_store %arg8[%c0_71, %c0_72], %298 {strides = array<i32>} : memref<8x128xf32, #tpu.memory_space<vmem>>, vector<8x128xf32>,
    return
  }
  func.func @transform_0(%arg0: i32) -> (i32, i32) {
    %c0_i32 = arith.constant 0 : i32
    %c0_i32_0 = arith.constant 0 : i32
    return %arg0, %c0_i32 : i32, i32
  }
  func.func @transform_1(%arg0: i32) -> (i32, i32) {
    %c0_i32 = arith.constant 0 : i32
    %c0_i32_0 = arith.constant 0 : i32
    %c0_i32_1 = arith.constant 0 : i32
    return %c0_i32, %c0_i32_0 : i32, i32
  }
  func.func @transform_2(%arg0: i32) -> (i32, i32) {
    %c0_i32 = arith.constant 0 : i32
    %c0_i32_0 = arith.constant 0 : i32
    %c0_i32_1 = arith.constant 0 : i32
    return %c0_i32, %c0_i32_0 : i32, i32
  }
  func.func @transform_3(%arg0: i32) -> (i32, i32) {
    %c0_i32 = arith.constant 0 : i32
    %c0_i32_0 = arith.constant 0 : i32
    %c0_i32_1 = arith.constant 0 : i32
    return %c0_i32, %c0_i32_0 : i32, i32
  }
  func.func @transform_4(%arg0: i32) -> (i32, i32) {
    %c0_i32 = arith.constant 0 : i32
    %c0_i32_0 = arith.constant 0 : i32
    %c0_i32_1 = arith.constant 0 : i32
    return %c0_i32, %c0_i32_0 : i32, i32
  }
  func.func @transform_5(%arg0: i32) -> (i32, i32) {
    %c0_i32 = arith.constant 0 : i32
    %c0_i32_0 = arith.constant 0 : i32
    %c0_i32_1 = arith.constant 0 : i32
    return %c0_i32, %c0_i32_0 : i32, i32
  }
  func.func @transform_6(%arg0: i32) -> (i32, i32) {
    %c0_i32 = arith.constant 0 : i32
    %c0_i32_0 = arith.constant 0 : i32
    return %arg0, %c0_i32 : i32, i32
  }
}

</mosaic_0001>

<llo_original>
// kernel: tpu_custom_call.1
$region0: #{tpu_custom_call.1}
  #allocation0 [shape = 'u32[]', space=smem, size = 0x4, offset = 0x4, fixed_abs, tag = 'smem constant byte address 0x4 - core index']
  #allocation1 [shape = 'u32[72,128]{1,0:T(1,128)}', space=vmem, size = 0x9000, scoped, tag = 'internal scratch']
  #allocation2 [shape = 'f32[8,128]{1,0:T(8,128)}', space=vmem, size = 0x1000, scoped, tag = 'scratch operand']
  #allocation3 [shape = 'f32[64,384]{1,0:T(8,128)}', space=vmem, size = 0x18000, scoped, tag = 'scratch operand']
  %s0 = inlined_call_operand.hbm [shape: bf16[64,128], index: 0, kind: input, shape index: {}]
  %s1 = inlined_call_operand.hbm [shape: f32[8,128], index: 1, kind: input, shape index: {}]
  %s2 = inlined_call_operand.hbm [shape: bf16[128,384], index: 2, kind: input, shape index: {}]
  %s3 = inlined_call_operand.hbm [shape: f32[1,384], index: 3, kind: input, shape index: {}]
  %s4 = inlined_call_operand.hbm [shape: bf16[128,384], index: 4, kind: input, shape index: {}]
  %s5 = inlined_call_operand.vmem [shape: f32[1,128], index: 5, kind: input, shape index: {}]
  %s6 = inlined_call_operand.hbm [shape: f32[64,128], index: 6, kind: output, shape index: {}]
  %s7 = sld [smem:[#allocation0]]
  $region58: #{tpu_custom_call.1} parent=0
    _
  %s9 = ssub.s32 1, %s7
  %s10 = scalar_select 0, %s9, %s7
  $region1: #{tpu_custom_call.1} parent=0
    #allocation4 [shape = 'u8[16384]{0}', space=vmem, size = 0x4000, scoped, tag = 'input window, operand 0, single buffered']
    #allocation5 [shape = 's32[1]{0}', space=sflag, size = 0x4, scoped, tag = 'scoped memory for tpu_custom_call.1']
    #allocation6 [shape = 's32[1]{0}', space=sflag, size = 0x4, scoped, tag = 'scoped memory for tpu_custom_call.1']
    #allocation7 [shape = 'u8[4096]{0}', space=vmem, size = 0x1000, scoped, tag = 'input window, operand 1, single buffered']
    #allocation8 [shape = 's32[1]{0}', space=sflag, size = 0x4, scoped, tag = 'scoped memory for tpu_custom_call.1']
    #allocation9 [shape = 'u8[98304]{0}', space=vmem, size = 0x18000, scoped, tag = 'input window, operand 2, single buffered']
    #allocation10 [shape = 'u8[1536]{0}', space=vmem, size = 0x800, scoped, tag = 'input window, operand 3, single buffered']
    #allocation11 [shape = 's32[1]{0}', space=sflag, size = 0x4, scoped, tag = 'scoped memory for tpu_custom_call.1']
    #allocation12 [shape = 'u8[98304]{0}', space=vmem, size = 0x18000, scoped, tag = 'input window, operand 4, single buffered']
    #allocation13 [shape = 'u8[32768]{0}', space=vmem, size = 0x8000, scoped, tag = 'output window, operand 0, single buffered']
    %11 = vsyncpa [#allocation5], 0
    %12 = vsyncpa [#allocation8], 0
    %13 = vsyncpa [#allocation11], 0
    %14 = vsyncpa [#allocation6], 0
    // Predicated region
    $region2: #{tpu_custom_call.1} parent=1 // pred_check
      _
    $region3: #{tpu_custom_call.1} parent=1 // pred_check_branch
      %16 = sbr.rel (0) target = $region5
    $region4: #{tpu_custom_call.1} parent=1 // pred_region
      %18 = vsyncadd [#allocation5], 0
      %s19 = sshll.u32 %s0, 4
      %s20 = int_to_ptr.hbm [resolvable:$true] %s19
      %s21 = sshll.u32 [#allocation4], 4
      %s22 = int_to_ptr.vmem [resolvable:$true] %s21
      %27 = dma.hbm_to_vmem [thread:$0]  %s20, 512, %s22, [#allocation5], 64, 64, 4
    $region5: #{tpu_custom_call.1} parent=1 // pred_fallthru
      _
    // Predicated region
    $region6: #{tpu_custom_call.1} parent=1 // pred_check
      _
    $region7: #{tpu_custom_call.1} parent=1 // pred_check_branch
      %29 = sbr.rel (0) target = $region9
    $region8: #{tpu_custom_call.1} parent=1 // pred_region
      %31 = vsyncadd [#allocation8], 0
      %s33 = sshll.u32 %s1, 4
      %s34 = int_to_ptr.hbm [resolvable:$true] %s33
      %s35 = sshll.u32 [#allocation7], 4
      %s36 = int_to_ptr.vmem [resolvable:$true] %s35
      %38 = dma.hbm_to_vmem [thread:$0]  %s34, 128, %s36, [#allocation8]
    $region9: #{tpu_custom_call.1} parent=1 // pred_fallthru
      _
    // Predicated region
    $region10: #{tpu_custom_call.1} parent=1 // pred_check
      _
    $region11: #{tpu_custom_call.1} parent=1 // pred_check_branch
      %40 = sbr.rel (0) target = $region13
    $region12: #{tpu_custom_call.1} parent=1 // pred_region
      %42 = vsyncadd [#allocation8], 0
      %s43 = sshll.u32 %s2, 4
      %s44 = int_to_ptr.hbm [resolvable:$true] %s43
      %s45 = sshll.u32 [#allocation9], 4
      %s46 = int_to_ptr.vmem [resolvable:$true] %s45
      %51 = dma.hbm_to_vmem [thread:$0]  %s44, 3072, %s46, [#allocation8], 192, 192, 12
    $region13: #{tpu_custom_call.1} parent=1 // pred_fallthru
      _
    // Predicated region
    $region14: #{tpu_custom_call.1} parent=1 // pred_check
      _
    $region15: #{tpu_custom_call.1} parent=1 // pred_check_branch
      %53 = sbr.rel (0) target = $region17
    $region16: #{tpu_custom_call.1} parent=1 // pred_region
      %55 = vsyncadd [#allocation11], 0
      %s57 = sshll.u32 %s3, 4
      %s58 = int_to_ptr.hbm [resolvable:$true] %s57
      %s59 = sshll.u32 [#allocation10], 4
      %s60 = int_to_ptr.vmem [resolvable:$true] %s59
      %62 = dma.hbm_to_vmem [thread:$0]  %s58, 48, %s60, [#allocation11]
    $region17: #{tpu_custom_call.1} parent=1 // pred_fallthru
      _
    // Predicated region
    $region18: #{tpu_custom_call.1} parent=1 // pred_check
      _
    $region19: #{tpu_custom_call.1} parent=1 // pred_check_branch
      %64 = sbr.rel (0) target = $region21
    $region20: #{tpu_custom_call.1} parent=1 // pred_region
      %66 = vsyncadd [#allocation11], 0
      %s67 = sshll.u32 %s4, 4
      %s68 = int_to_ptr.hbm [resolvable:$true] %s67
      %s69 = sshll.u32 [#allocation12], 4
      %s70 = int_to_ptr.vmem [resolvable:$true] %s69
      %75 = dma.hbm_to_vmem [thread:$0]  %s68, 3072, %s70, [#allocation11], 192, 192, 12
    $region21: #{tpu_custom_call.1} parent=1 // pred_fallthru
      _
    // Predicated region
    $region22: #{tpu_custom_call.1} parent=1 // pred_check
      _
    $region23: #{tpu_custom_call.1} parent=1 // pred_check_branch
      %77 = sbr.rel (0) target = $region25
    $region24: #{tpu_custom_call.1} parent=1 // pred_region
      _
    $region25: #{tpu_custom_call.1} parent=1 // pred_fallthru
      _
    // Predicated region
    $region26: #{tpu_custom_call.1} parent=1 // pred_check
      _
    $region27: #{tpu_custom_call.1} parent=1 // pred_check_branch
      %79 = sbr.rel (0) target = $region29
    $region28: #{tpu_custom_call.1} parent=1 // pred_region
      %81 = dma.done [#allocation5], 512
    $region29: #{tpu_custom_call.1} parent=1 // pred_fallthru
      _
    // Predicated region
    $region30: #{tpu_custom_call.1} parent=1 // pred_check
      _
    $region31: #{tpu_custom_call.1} parent=1 // pred_check_branch
      %83 = sbr.rel (0) target = $region33
    $region32: #{tpu_custom_call.1} parent=1 // pred_region
      %85 = dma.done [#allocation8], 128
    $region33: #{tpu_custom_call.1} parent=1 // pred_fallthru
      _
    // Predicated region
    $region34: #{tpu_custom_call.1} parent=1 // pred_check
      _
    $region35: #{tpu_custom_call.1} parent=1 // pred_check_branch
      %87 = sbr.rel (0) target = $region37
    $region36: #{tpu_custom_call.1} parent=1 // pred_region
      %89 = dma.done [#allocation8], 3072
    $region37: #{tpu_custom_call.1} parent=1 // pred_fallthru
      _
    // Predicated region
    $region38: #{tpu_custom_call.1} parent=1 // pred_check
      _
    $region39: #{tpu_custom_call.1} parent=1 // pred_check_branch
      %91 = sbr.rel (0) target = $region41
    $region40: #{tpu_custom_call.1} parent=1 // pred_region
      %93 = dma.done [#allocation11], 48
    $region41: #{tpu_custom_call.1} parent=1 // pred_fallthru
      _
    // Predicated region
    $region42: #{tpu_custom_call.1} parent=1 // pred_check
      _
    $region43: #{tpu_custom_call.1} parent=1 // pred_check_branch
      %95 = sbr.rel (0) target = $region45
    $region44: #{tpu_custom_call.1} parent=1 // pred_region
      %97 = dma.done [#allocation11], 3072
    $region45: #{tpu_custom_call.1} parent=1 // pred_fallthru
      _
    %p98 = scmp.eq.s32.totalorder 0, 0
    // Predicated region
    $region46: #{tpu_custom_call.1} parent=1 // pred_check
      %p99 = pneg %p98
    $region47: #{tpu_custom_call.1} parent=1 // pred_check_branch
      %101 = sbr.rel (%p99) target = $region49
    $region48: #{tpu_custom_call.1} parent=1 // pred_region
      %v102 = vld [vmem:[#allocation7] sm:$0xff]
      %103 = vst [vmem:[#allocation2] sm:$0xff] %v102
    $region49: #{tpu_custom_call.1} parent=1 // pred_fallthru
      _
    %v104 = vld [vmem:[#allocation4] sm:$0xf]
    %v105 = vld [vmem:[#allocation4 + $0x4] sm:$0xf]
    %v106 = vld [vmem:[#allocation4 + $0x8] sm:$0xf]
    %v107 = vld [vmem:[#allocation4 + $0xc] sm:$0xf]
    %v108 = vld [vmem:[#allocation4 + $0x10] sm:$0xf]
    %v109 = vld [vmem:[#allocation4 + $0x14] sm:$0xf]
    %v110 = vld [vmem:[#allocation4 + $0x18] sm:$0xf]
    %v111 = vld [vmem:[#allocation4 + $0x1c] sm:$0xf]
    %v112 = vld [vmem:[#allocation9] sm:$0xff]
    %v113 = vld [vmem:[#allocation9 + $0x8] sm:$0xf]
    %v114 = vld [vmem:[#allocation9 + $0xc] sm:$0xff]
    %v115 = vld [vmem:[#allocation9 + $0x14] sm:$0xf]
    %v116 = vld [vmem:[#allocation9 + $0x18] sm:$0xff]
    %v117 = vld [vmem:[#allocation9 + $0x20] sm:$0xf]
    %v118 = vld [vmem:[#allocation9 + $0x24] sm:$0xff]
    %v119 = vld [vmem:[#allocation9 + $0x2c] sm:$0xf]
    %v120 = vld [vmem:[#allocation9 + $0x30] sm:$0xff]
    %v121 = vld [vmem:[#allocation9 + $0x38] sm:$0xf]
    %v122 = vld [vmem:[#allocation9 + $0x3c] sm:$0xff]
    %v123 = vld [vmem:[#allocation9 + $0x44] sm:$0xf]
    %v124 = vld [vmem:[#allocation9 + $0x48] sm:$0xff]
    %v125 = vld [vmem:[#allocation9 + $0x50] sm:$0xf]
    %v126 = vld [vmem:[#allocation9 + $0x54] sm:$0xff]
    %v127 = vld [vmem:[#allocation9 + $0x5c] sm:$0xf]
    %v128 = vld [vmem:[#allocation9 + $0x60] sm:$0xff]
    %v129 = vld [vmem:[#allocation9 + $0x68] sm:$0xf]
    %v130 = vld [vmem:[#allocation9 + $0x6c] sm:$0xff]
    %v131 = vld [vmem:[#allocation9 + $0x74] sm:$0xf]
    %v132 = vld [vmem:[#allocation9 + $0x78] sm:$0xff]
    %v133 = vld [vmem:[#allocation9 + $0x80] sm:$0xf]
    %v134 = vld [vmem:[#allocation9 + $0x84] sm:$0xff]
    %v135 = vld [vmem:[#allocation9 + $0x8c] sm:$0xf]
    %v136 = vld [vmem:[#allocation9 + $0x90] sm:$0xff]
    %v137 = vld [vmem:[#allocation9 + $0x98] sm:$0xf]
    %v138 = vld [vmem:[#allocation9 + $0x9c] sm:$0xff]
    %v139 = vld [vmem:[#allocation9 + $0xa4] sm:$0xf]
    %v140 = vld [vmem:[#allocation9 + $0xa8] sm:$0xff]
    %v141 = vld [vmem:[#allocation9 + $0xb0] sm:$0xf]
    %v142 = vld [vmem:[#allocation9 + $0xb4] sm:$0xff]
    %v143 = vld [vmem:[#allocation9 + $0xbc] sm:$0xf]
    %v144 = vld [vmem:[#allocation10] sm:$0x7]
    %v146 = vperm.slane %v144, 0
    %v147 = vperm.slane %v144, 1
    %v148 = vperm.slane %v144, 2
    %v160 = vunpack.c.l.b16 %v104
    %v161 = vunpack.c.l.b16 %v105
    %v162 = vunpack.c.l.b16 %v106
    %v163 = vunpack.c.l.b16 %v107
    %v164 = vunpack.c.l.b16 %v108
    %v165 = vunpack.c.l.b16 %v109
    %v166 = vunpack.c.l.b16 %v110
    %v167 = vunpack.c.l.b16 %v111
    %v168 = vpack.c.b16 %v161, %v160
    %v169 = vpack.c.b16 %v163, %v162
    %v170 = vpack.c.b16 %v165, %v164
    %v171 = vpack.c.b16 %v167, %v166
    %v208 = vunpack.c.l.b16 %v112
    %v209 = vunpack.c.h.b16 %v112
    %v210 = vunpack.c.l.b16 %v113
    %v211 = vunpack.c.l.b16 %v114
    %v212 = vunpack.c.h.b16 %v114
    %v213 = vunpack.c.l.b16 %v115
    %v214 = vunpack.c.l.b16 %v116
    %v215 = vunpack.c.h.b16 %v116
    %v216 = vunpack.c.l.b16 %v117
    %v217 = vunpack.c.l.b16 %v118
    %v218 = vunpack.c.h.b16 %v118
    %v219 = vunpack.c.l.b16 %v119
    %v220 = vunpack.c.l.b16 %v120
    %v221 = vunpack.c.h.b16 %v120
    %v222 = vunpack.c.l.b16 %v121
    %v223 = vunpack.c.l.b16 %v122
    %v224 = vunpack.c.h.b16 %v122
    %v225 = vunpack.c.l.b16 %v123
    %v226 = vunpack.c.l.b16 %v124
    %v227 = vunpack.c.h.b16 %v124
    %v228 = vunpack.c.l.b16 %v125
    %v229 = vunpack.c.l.b16 %v126
    %v230 = vunpack.c.h.b16 %v126
    %v231 = vunpack.c.l.b16 %v127
    %v232 = vunpack.c.l.b16 %v128
    %v233 = vunpack.c.h.b16 %v128
    %v234 = vunpack.c.l.b16 %v129
    %v235 = vunpack.c.l.b16 %v130
    %v236 = vunpack.c.h.b16 %v130
    %v237 = vunpack.c.l.b16 %v131
    %v238 = vunpack.c.l.b16 %v132
    %v239 = vunpack.c.h.b16 %v132
    %v240 = vunpack.c.l.b16 %v133
    %v241 = vunpack.c.l.b16 %v134
    %v242 = vunpack.c.h.b16 %v134
    %v243 = vunpack.c.l.b16 %v135
    %v244 = vunpack.c.l.b16 %v136
    %v245 = vunpack.c.h.b16 %v136
    %v246 = vunpack.c.l.b16 %v137
    %v247 = vunpack.c.l.b16 %v138
    %v248 = vunpack.c.h.b16 %v138
    %v249 = vunpack.c.l.b16 %v139
    %v250 = vunpack.c.l.b16 %v140
    %v251 = vunpack.c.h.b16 %v140
    %v252 = vunpack.c.l.b16 %v141
    %v253 = vunpack.c.l.b16 %v142
    %v254 = vunpack.c.h.b16 %v142
    %v255 = vunpack.c.l.b16 %v143
    %v256 = vpack.c.b16 %v211, %v208
    %v257 = vpack.c.b16 %v212, %v209
    %v258 = vpack.c.b16 %v213, %v210
    %v259 = vpack.c.b16 %v217, %v214
    %v260 = vpack.c.b16 %v218, %v215
    %v261 = vpack.c.b16 %v219, %v216
    %v262 = vpack.c.b16 %v223, %v220
    %v263 = vpack.c.b16 %v224, %v221
    %v264 = vpack.c.b16 %v225, %v222
    %v265 = vpack.c.b16 %v229, %v226
    %v266 = vpack.c.b16 %v230, %v227
    %v267 = vpack.c.b16 %v231, %v228
    %v268 = vpack.c.b16 %v235, %v232
    %v269 = vpack.c.b16 %v236, %v233
    %v270 = vpack.c.b16 %v237, %v234
    %v271 = vpack.c.b16 %v241, %v238
    %v272 = vpack.c.b16 %v242, %v239
    %v273 = vpack.c.b16 %v243, %v240
    %v274 = vpack.c.b16 %v247, %v244
    %v275 = vpack.c.b16 %v248, %v245
    %v276 = vpack.c.b16 %v249, %v246
    %v277 = vpack.c.b16 %v253, %v250
    %v278 = vpack.c.b16 %v254, %v251
    %v279 = vpack.c.b16 %v255, %v252
    %304 = vmatpush.bf16.msra.mxu0 %v277
    %305 = vmatpush.bf16.msra.mxu0 %v274
    %306 = vmatpush.bf16.msra.mxu0 %v271
    %307 = vmatpush.bf16.msra.mxu0 %v268
    %308 = vmatpush.bf16.msra.mxu0 %v265
    %309 = vmatpush.bf16.msra.mxu0 %v262
    %310 = vmatpush.bf16.msra.mxu0 %v259
    %311 = vmatpush.bf16.msra.mxu0 %v256
    %312 = vmatmul.bf16.gmra.mxu0 %v168
    %v313 = vpop.f32.mrf.mxu0
    %v314 = vadd.f32 %v146, %v313
    %v315 = vpop.f32.mrf.mxu0
    %v316 = vadd.f32 %v146, %v315
    %317 = vmatmul.bf16.gmra.mxu0 %v169
    %v318 = vpop.f32.mrf.mxu0
    %v319 = vadd.f32 %v146, %v318
    %v320 = vpop.f32.mrf.mxu0
    %v321 = vadd.f32 %v146, %v320
    %322 = vmatmul.bf16.gmra.mxu0 %v170
    %v323 = vpop.f32.mrf.mxu0
    %v324 = vadd.f32 %v146, %v323
    %v325 = vpop.f32.mrf.mxu0
    %v326 = vadd.f32 %v146, %v325
    %327 = vmatmul.bf16.gmra.mxu0 %v171
    %v328 = vpop.f32.mrf.mxu0
    %v329 = vadd.f32 %v146, %v328
    %v330 = vpop.f32.mrf.mxu0
    %v331 = vadd.f32 %v146, %v330
    %332 = vdwg.mxu0
    %333 = vmatpush.bf16.msra.mxu0 %v278
    %334 = vmatpush.bf16.msra.mxu0 %v275
    %335 = vmatpush.bf16.msra.mxu0 %v272
    %336 = vmatpush.bf16.msra.mxu0 %v269
    %337 = vmatpush.bf16.msra.mxu0 %v266
    %338 = vmatpush.bf16.msra.mxu0 %v263
    %339 = vmatpush.bf16.msra.mxu0 %v260
    %340 = vmatpush.bf16.msra.mxu0 %v257
    %341 = vmatmul.bf16.gmra.mxu0 %v168
    %v342 = vpop.f32.mrf.mxu0
    %v343 = vadd.f32 %v147, %v342
    %v344 = vpop.f32.mrf.mxu0
    %v345 = vadd.f32 %v147, %v344
    %346 = vmatmul.bf16.gmra.mxu0 %v169
    %v347 = vpop.f32.mrf.mxu0
    %v348 = vadd.f32 %v147, %v347
    %v349 = vpop.f32.mrf.mxu0
    %v350 = vadd.f32 %v147, %v349
    %351 = vmatmul.bf16.gmra.mxu0 %v170
    %v352 = vpop.f32.mrf.mxu0
    %v353 = vadd.f32 %v147, %v352
    %v354 = vpop.f32.mrf.mxu0
    %v355 = vadd.f32 %v147, %v354
    %356 = vmatmul.bf16.gmra.mxu0 %v171
    %v357 = vpop.f32.mrf.mxu0
    %v358 = vadd.f32 %v147, %v357
    %v359 = vpop.f32.mrf.mxu0
    %v360 = vadd.f32 %v147, %v359
    %361 = vdwg.mxu0
    %362 = vmatpush.bf16.msra.mxu0 %v279
    %363 = vmatpush.bf16.msra.mxu0 %v276
    %364 = vmatpush.bf16.msra.mxu0 %v273
    %365 = vmatpush.bf16.msra.mxu0 %v270
    %366 = vmatpush.bf16.msra.mxu0 %v267
    %367 = vmatpush.bf16.msra.mxu0 %v264
    %368 = vmatpush.bf16.msra.mxu0 %v261
    %369 = vmatpush.bf16.msra.mxu0 %v258
    %370 = vmatmul.bf16.gmra.mxu0 %v168
    %v371 = vpop.f32.mrf.mxu0
    %v372 = vadd.f32 %v148, %v371
    %v373 = vpop.f32.mrf.mxu0
    %v374 = vadd.f32 %v148, %v373
    %375 = vmatmul.bf16.gmra.mxu0 %v169
    %v376 = vpop.f32.mrf.mxu0
    %v377 = vadd.f32 %v148, %v376
    %v378 = vpop.f32.mrf.mxu0
    %v379 = vadd.f32 %v148, %v378
    %380 = vmatmul.bf16.gmra.mxu0 %v170
    %v381 = vpop.f32.mrf.mxu0
    %v382 = vadd.f32 %v148, %v381
    %v383 = vpop.f32.mrf.mxu0
    %v384 = vadd.f32 %v148, %v383
    %385 = vmatmul.bf16.gmra.mxu0 %v171
    %v386 = vpop.f32.mrf.mxu0
    %v387 = vadd.f32 %v148, %v386
    %v388 = vpop.f32.mrf.mxu0
    %v389 = vadd.f32 %v148, %v388
    %390 = vdwg.mxu0
    %391 = vst [vmem:[#allocation3] sm:$0xff] %v314
    %392 = vst [vmem:[#allocation3 + $0x8] sm:$0xff] %v343
    %393 = vst [vmem:[#allocation3 + $0x10] sm:$0xff] %v372
    %394 = vst [vmem:[#allocation3 + $0x18] sm:$0xff] %v316
    %395 = vst [vmem:[#allocation3 + $0x20] sm:$0xff] %v345
    %396 = vst [vmem:[#allocation3 + $0x28] sm:$0xff] %v374
    %397 = vst [vmem:[#allocation3 + $0x30] sm:$0xff] %v319
    %398 = vst [vmem:[#allocation3 + $0x38] sm:$0xff] %v348
    %399 = vst [vmem:[#allocation3 + $0x40] sm:$0xff] %v377
    %400 = vst [vmem:[#allocation3 + $0x48] sm:$0xff] %v321
    %401 = vst [vmem:[#allocation3 + $0x50] sm:$0xff] %v350
    %402 = vst [vmem:[#allocation3 + $0x58] sm:$0xff] %v379
    %403 = vst [vmem:[#allocation3 + $0x60] sm:$0xff] %v324
    %404 = vst [vmem:[#allocation3 + $0x68] sm:$0xff] %v353
    %405 = vst [vmem:[#allocation3 + $0x70] sm:$0xff] %v382
    %406 = vst [vmem:[#allocation3 + $0x78] sm:$0xff] %v326
    %407 = vst [vmem:[#allocation3 + $0x80] sm:$0xff] %v355
    %408 = vst [vmem:[#allocation3 + $0x88] sm:$0xff] %v384
    %409 = vst [vmem:[#allocation3 + $0x90] sm:$0xff] %v329
    %410 = vst [vmem:[#allocation3 + $0x98] sm:$0xff] %v358
    %411 = vst [vmem:[#allocation3 + $0xa0] sm:$0xff] %v387
    %412 = vst [vmem:[#allocation3 + $0xa8] sm:$0xff] %v331
    %413 = vst [vmem:[#allocation3 + $0xb0] sm:$0xff] %v360
    %414 = vst [vmem:[#allocation3 + $0xb8] sm:$0xff] %v389
    %v415 = vld [vmem:[#allocation12] sm:$0xff]
    %v416 = vld [vmem:[#allocation12 + $0x8] sm:$0xf]
    %v417 = vld [vmem:[#allocation12 + $0xc] sm:$0xff]
    %v418 = vld [vmem:[#allocation12 + $0x14] sm:$0xf]
    %v419 = vld [vmem:[#allocation12 + $0x18] sm:$0xff]
    %v420 = vld [vmem:[#allocation12 + $0x20] sm:$0xf]
    %v421 = vld [vmem:[#allocation12 + $0x24] sm:$0xff]
    %v422 = vld [vmem:[#allocation12 + $0x2c] sm:$0xf]
    %v423 = vld [vmem:[#allocation12 + $0x30] sm:$0xff]
    %v424 = vld [vmem:[#allocation12 + $0x38] sm:$0xf]
    %v425 = vld [vmem:[#allocation12 + $0x3c] sm:$0xff]
    %v426 = vld [vmem:[#allocation12 + $0x44] sm:$0xf]
    %v427 = vld [vmem:[#allocation12 + $0x48] sm:$0xff]
    %v428 = vld [vmem:[#allocation12 + $0x50] sm:$0xf]
    %v429 = vld [vmem:[#allocation12 + $0x54] sm:$0xff]
    %v430 = vld [vmem:[#allocation12 + $0x5c] sm:$0xf]
    %v431 = vld [vmem:[#allocation12 + $0x60] sm:$0xff]
    %v432 = vld [vmem:[#allocation12 + $0x68] sm:$0xf]
    %v433 = vld [vmem:[#allocation12 + $0x6c] sm:$0xff]
    %v434 = vld [vmem:[#allocation12 + $0x74] sm:$0xf]
    %v435 = vld [vmem:[#allocation12 + $0x78] sm:$0xff]
    %v436 = vld [vmem:[#allocation12 + $0x80] sm:$0xf]
    %v437 = vld [vmem:[#allocation12 + $0x84] sm:$0xff]
    %v438 = vld [vmem:[#allocation12 + $0x8c] sm:$0xf]
    %v439 = vld [vmem:[#allocation12 + $0x90] sm:$0xff]
    %v440 = vld [vmem:[#allocation12 + $0x98] sm:$0xf]
    %v441 = vld [vmem:[#allocation12 + $0x9c] sm:$0xff]
    %v442 = vld [vmem:[#allocation12 + $0xa4] sm:$0xf]
    %v443 = vld [vmem:[#allocation12 + $0xa8] sm:$0xff]
    %v444 = vld [vmem:[#allocation12 + $0xb0] sm:$0xf]
    %v445 = vld [vmem:[#allocation12 + $0xb4] sm:$0xff]
    %v446 = vld [vmem:[#allocation12 + $0xbc] sm:$0xf]
    %v447 = vld [vmem:[%s5] sm:$0x1]
    %v448 = vld [vmem:[#allocation2] sm:$0xff]
    %s449 = smul.u32 0, 3
    %s450 = smul.addr %s449, 8
    %s451 = scalar_lea.vmem [#allocation3], %s450
    %v452 = vld [vmem:[%s451] sm:$0xff]
    %v453 = vld [vmem:[%s451 + $0x8] sm:$0xff]
    %v454 = vld [vmem:[%s451 + $0x10] sm:$0xff]
    %v455 = vpack.c.bf16 %v448, %v448
    %v488 = vunpack.c.l.b16 %v415
    %v489 = vunpack.c.h.b16 %v415
    %v490 = vunpack.c.l.b16 %v416
    %v491 = vunpack.c.l.b16 %v417
    %v492 = vunpack.c.h.b16 %v417
    %v493 = vunpack.c.l.b16 %v418
    %v494 = vunpack.c.l.b16 %v419
    %v495 = vunpack.c.h.b16 %v419
    %v496 = vunpack.c.l.b16 %v420
    %v497 = vunpack.c.l.b16 %v421
    %v498 = vunpack.c.h.b16 %v421
    %v499 = vunpack.c.l.b16 %v422
    %v500 = vunpack.c.l.b16 %v423
    %v501 = vunpack.c.h.b16 %v423
    %v502 = vunpack.c.l.b16 %v424
    %v503 = vunpack.c.l.b16 %v425
    %v504 = vunpack.c.h.b16 %v425
    %v505 = vunpack.c.l.b16 %v426
    %v506 = vunpack.c.l.b16 %v427
    %v507 = vunpack.c.h.b16 %v427
    %v508 = vunpack.c.l.b16 %v428
    %v509 = vunpack.c.l.b16 %v429
    %v510 = vunpack.c.h.b16 %v429
    %v511 = vunpack.c.l.b16 %v430
    %v512 = vunpack.c.l.b16 %v431
    %v513 = vunpack.c.h.b16 %v431
    %v514 = vunpack.c.l.b16 %v432
    %v515 = vunpack.c.l.b16 %v433
    %v516 = vunpack.c.h.b16 %v433
    %v517 = vunpack.c.l.b16 %v434
    %v518 = vunpack.c.l.b16 %v435
    %v519 = vunpack.c.h.b16 %v435
    %v520 = vunpack.c.l.b16 %v436
    %v521 = vunpack.c.l.b16 %v437
    %v522 = vunpack.c.h.b16 %v437
    %v523 = vunpack.c.l.b16 %v438
    %v524 = vunpack.c.l.b16 %v439
    %v525 = vunpack.c.h.b16 %v439
    %v526 = vunpack.c.l.b16 %v440
    %v527 = vunpack.c.l.b16 %v441
    %v528 = vunpack.c.h.b16 %v441
    %v529 = vunpack.c.l.b16 %v442
    %v530 = vunpack.c.l.b16 %v443
    %v531 = vunpack.c.h.b16 %v443
    %v532 = vunpack.c.l.b16 %v444
    %v533 = vunpack.c.l.b16 %v445
    %v534 = vunpack.c.h.b16 %v445
    %v535 = vunpack.c.l.b16 %v446
    %v536 = vpack.c.b16 %v491, %v488
    %v537 = vpack.c.b16 %v492, %v489
    %v538 = vpack.c.b16 %v493, %v490
    %v539 = vpack.c.b16 %v497, %v494
    %v540 = vpack.c.b16 %v498, %v495
    %v541 = vpack.c.b16 %v499, %v496
    %v542 = vpack.c.b16 %v503, %v500
    %v543 = vpack.c.b16 %v504, %v501
    %v544 = vpack.c.b16 %v505, %v502
    %v545 = vpack.c.b16 %v509, %v506
    %v546 = vpack.c.b16 %v510, %v507
    %v547 = vpack.c.b16 %v511, %v508
    %v548 = vpack.c.b16 %v515, %v512
    %v549 = vpack.c.b16 %v516, %v513
    %v550 = vpack.c.b16 %v517, %v514
    %v551 = vpack.c.b16 %v521, %v518
    %v552 = vpack.c.b16 %v522, %v519
    %v553 = vpack.c.b16 %v523, %v520
    %v554 = vpack.c.b16 %v527, %v524
    %v555 = vpack.c.b16 %v528, %v525
    %v556 = vpack.c.b16 %v529, %v526
    %v557 = vpack.c.b16 %v533, %v530
    %v558 = vpack.c.b16 %v534, %v531
    %v559 = vpack.c.b16 %v535, %v532
    %584 = vmatpush.bf16.msra.mxu0 %v557
    %585 = vmatpush.bf16.msra.mxu0 %v554
    %586 = vmatpush.bf16.msra.mxu0 %v551
    %587 = vmatpush.bf16.msra.mxu0 %v548
    %588 = vmatpush.bf16.msra.mxu0 %v545
    %589 = vmatpush.bf16.msra.mxu0 %v542
    %590 = vmatpush.bf16.msra.mxu0 %v539
    %591 = vmatpush.bf16.msra.mxu0 %v536
    %592 = vmatmul.bf16.gmra.mxu0 %v455
    %v593 = vpop.f32.mrf.mxu0
    %v594 = vadd.f32 0.0, %v593
    %v595 = vpop.f32.mrf.mxu0
    %596 = vdwg.mxu0
    %597 = vmatpush.bf16.msra.mxu0 %v558
    %598 = vmatpush.bf16.msra.mxu0 %v555
    %599 = vmatpush.bf16.msra.mxu0 %v552
    %600 = vmatpush.bf16.msra.mxu0 %v549
    %601 = vmatpush.bf16.msra.mxu0 %v546
    %602 = vmatpush.bf16.msra.mxu0 %v543
    %603 = vmatpush.bf16.msra.mxu0 %v540
    %604 = vmatpush.bf16.msra.mxu0 %v537
    %605 = vmatmul.bf16.gmra.mxu0 %v455
    %v606 = vpop.f32.mrf.mxu0
    %v607 = vadd.f32 0.0, %v606
    %v608 = vpop.f32.mrf.mxu0
    %609 = vdwg.mxu0
    %610 = vmatpush.bf16.msra.mxu0 %v559
    %611 = vmatpush.bf16.msra.mxu0 %v556
    %612 = vmatpush.bf16.msra.mxu0 %v553
    %613 = vmatpush.bf16.msra.mxu0 %v550
    %614 = vmatpush.bf16.msra.mxu0 %v547
    %615 = vmatpush.bf16.msra.mxu0 %v544
    %616 = vmatpush.bf16.msra.mxu0 %v541
    %617 = vmatpush.bf16.msra.mxu0 %v538
    %618 = vmatmul.bf16.gmra.mxu0 %v455
    %v619 = vpop.f32.mrf.mxu0
    %v620 = vadd.f32 0.0, %v619
    %v621 = vpop.f32.mrf.mxu0
    %622 = vdwg.mxu0
    %v623 = vadd.f32 %v452, %v594
    %v624 = vxor.u32 %v623, 2147483648
    %v625 = vmul.f32 %v624, 1.442695
    %v626 = vpow.pop %v625
    %v627 = vadd.f32 %v626, 1.0
    %v628 = vrcp.pop %v627
    %v629 = vmul.f32 %v627, %v628
    %v630 = vsub.f32 1.0, %v629
    %v631 = vmul.f32 %v628, %v630
    %v632 = vadd.f32 %v628, %v631
    %vm633 = vweird.f32 %v627
    %vm634 = vweird.f32 %v628
    %vm635 = vmor %vm633, %vm634
    %v636 = vsel %vm635, %v628, %v632
    %v637 = vand.u32 2147483647, %v627
    %vm638 = vcmp.eq.f32.partialorder %v637, 8.507059e+37
    %v639 = vand.u32 %v627, 2147483648
    %v640 = vor.u32 1.1754944e-38, %v639
    %v641 = vsel %vm638, %v640, %v636
    %v642 = vmul.f32 1.0, %v641
    %v643 = vadd.f32 %v453, %v607
    %v644 = vxor.u32 %v643, 2147483648
    %v645 = vmul.f32 %v644, 1.442695
    %v646 = vpow.pop %v645
    %v647 = vadd.f32 %v646, 1.0
    %v648 = vrcp.pop %v647
    %v649 = vmul.f32 %v647, %v648
    %v650 = vsub.f32 1.0, %v649
    %v651 = vmul.f32 %v648, %v650
    %v652 = vadd.f32 %v648, %v651
    %vm653 = vweird.f32 %v647
    %vm654 = vweird.f32 %v648
    %vm655 = vmor %vm653, %vm654
    %v656 = vsel %vm655, %v648, %v652
    %v657 = vand.u32 2147483647, %v647
    %vm658 = vcmp.eq.f32.partialorder %v657, 8.507059e+37
    %v659 = vand.u32 %v647, 2147483648
    %v660 = vor.u32 1.1754944e-38, %v659
    %v661 = vsel %vm658, %v660, %v656
    %v662 = vmul.f32 1.0, %v661
    %v664 = vperm.slane %v447, 0
    %v666 = vadd.f32 %v620, %v664
    %v667 = vmul.f32 %v642, %v666
    %v668 = vadd.f32 %v454, %v667
    %v669 = vtanh.pop %v668
    %v670 = vsub.f32 1.0, %v662
    %v671 = vmul.f32 %v670, %v669
    %v672 = vmul.f32 %v662, %v448
    %v673 = vadd.f32 %v671, %v672
    %674 = vst [vmem:[#allocation13] sm:$0xff] %v673
    %s675 = smul.u32 1, 3
    %s676 = smul.addr %s675, 8
    %s677 = scalar_lea.vmem [#allocation3], %s676
    %v678 = vld [vmem:[%s677] sm:$0xff]
    %v679 = vld [vmem:[%s677 + $0x8] sm:$0xff]
    %v680 = vld [vmem:[%s677 + $0x10] sm:$0xff]
    %v681 = vpack.c.bf16 %v673, %v673
    %682 = vmatpush.bf16.msra.mxu0 %v557
    %683 = vmatpush.bf16.msra.mxu0 %v554
    %684 = vmatpush.bf16.msra.mxu0 %v551
    %685 = vmatpush.bf16.msra.mxu0 %v548
    %686 = vmatpush.bf16.msra.mxu0 %v545
    %687 = vmatpush.bf16.msra.mxu0 %v542
    %688 = vmatpush.bf16.msra.mxu0 %v539
    %689 = vmatpush.bf16.msra.mxu0 %v536
    %690 = vmatmul.bf16.gmra.mxu0 %v681
    %v691 = vpop.f32.mrf.mxu0
    %v692 = vadd.f32 0.0, %v691
    %v693 = vpop.f32.mrf.mxu0
    %694 = vdwg.mxu0
    %695 = vmatpush.bf16.msra.mxu0 %v558
    %696 = vmatpush.bf16.msra.mxu0 %v555
    %697 = vmatpush.bf16.msra.mxu0 %v552
    %698 = vmatpush.bf16.msra.mxu0 %v549
    %699 = vmatpush.bf16.msra.mxu0 %v546
    %700 = vmatpush.bf16.msra.mxu0 %v543
    %701 = vmatpush.bf16.msra.mxu0 %v540
    %702 = vmatpush.bf16.msra.mxu0 %v537
    %703 = vmatmul.bf16.gmra.mxu0 %v681
    %v704 = vpop.f32.mrf.mxu0
    %v705 = vadd.f32 0.0, %v704
    %v706 = vpop.f32.mrf.mxu0
    %707 = vdwg.mxu0
    %708 = vmatpush.bf16.msra.mxu0 %v559
    %709 = vmatpush.bf16.msra.mxu0 %v556
    %710 = vmatpush.bf16.msra.mxu0 %v553
    %711 = vmatpush.bf16.msra.mxu0 %v550
    %712 = vmatpush.bf16.msra.mxu0 %v547
    %713 = vmatpush.bf16.msra.mxu0 %v544
    %714 = vmatpush.bf16.msra.mxu0 %v541
    %715 = vmatpush.bf16.msra.mxu0 %v538
    %716 = vmatmul.bf16.gmra.mxu0 %v681
    %v717 = vpop.f32.mrf.mxu0
    %v718 = vadd.f32 0.0, %v717
    %v719 = vpop.f32.mrf.mxu0
    %720 = vdwg.mxu0
    %v721 = vadd.f32 %v678, %v692
    %v722 = vxor.u32 %v721, 2147483648
    %v723 = vmul.f32 %v722, 1.442695
    %v724 = vpow.pop %v723
    %v725 = vadd.f32 %v724, 1.0
    %v726 = vrcp.pop %v725
    %v727 = vmul.f32 %v725, %v726
    %v728 = vsub.f32 1.0, %v727
    %v729 = vmul.f32 %v726, %v728
    %v730 = vadd.f32 %v726, %v729
    %vm731 = vweird.f32 %v725
    %vm732 = vweird.f32 %v726
    %vm733 = vmor %vm731, %vm732
    %v734 = vsel %vm733, %v726, %v730
    %v735 = vand.u32 2147483647, %v725
    %vm736 = vcmp.eq.f32.partialorder %v735, 8.507059e+37
    %v737 = vand.u32 %v725, 2147483648
    %v738 = vor.u32 1.1754944e-38, %v737
    %v739 = vsel %vm736, %v738, %v734
    %v740 = vmul.f32 1.0, %v739
    %v741 = vadd.f32 %v679, %v705
    %v742 = vxor.u32 %v741, 2147483648
    %v743 = vmul.f32 %v742, 1.442695
    %v744 = vpow.pop %v743
    %v745 = vadd.f32 %v744, 1.0
    %v746 = vrcp.pop %v745
    %v747 = vmul.f32 %v745, %v746
    %v748 = vsub.f32 1.0, %v747
    %v749 = vmul.f32 %v746, %v748
    %v750 = vadd.f32 %v746, %v749
    %vm751 = vweird.f32 %v745
    %vm752 = vweird.f32 %v746
    %vm753 = vmor %vm751, %vm752
    %v754 = vsel %vm753, %v746, %v750
    %v755 = vand.u32 2147483647, %v745
    %vm756 = vcmp.eq.f32.partialorder %v755, 8.507059e+37
    %v757 = vand.u32 %v745, 2147483648
    %v758 = vor.u32 1.1754944e-38, %v757
    %v759 = vsel %vm756, %v758, %v754
    %v760 = vmul.f32 1.0, %v759
    %v761 = vadd.f32 %v718, %v664
    %v762 = vmul.f32 %v740, %v761
    %v763 = vadd.f32 %v680, %v762
    %v764 = vtanh.pop %v763
    %v765 = vsub.f32 1.0, %v760
    %v766 = vmul.f32 %v765, %v764
    %v767 = vmul.f32 %v760, %v673
    %v768 = vadd.f32 %v766, %v767
    %s769 = scalar_lea.vmem [#allocation13], 8
    %770 = vst [vmem:[%s769] sm:$0xff] %v768
    %s771 = smul.u32 2, 3
    %s772 = smul.addr %s771, 8
    %s773 = scalar_lea.vmem [#allocation3], %s772
    %v774 = vld [vmem:[%s773] sm:$0xff]
    %v775 = vld [vmem:[%s773 + $0x8] sm:$0xff]
    %v776 = vld [vmem:[%s773 + $0x10] sm:$0xff]
    %v777 = vpack.c.bf16 %v768, %v768
    %778 = vmatpush.bf16.msra.mxu0 %v557
    %779 = vmatpush.bf16.msra.mxu0 %v554
    %780 = vmatpush.bf16.msra.mxu0 %v551
    %781 = vmatpush.bf16.msra.mxu0 %v548
    %782 = vmatpush.bf16.msra.mxu0 %v545
    %783 = vmatpush.bf16.msra.mxu0 %v542
    %784 = vmatpush.bf16.msra.mxu0 %v539
    %785 = vmatpush.bf16.msra.mxu0 %v536
    %786 = vmatmul.bf16.gmra.mxu0 %v777
    %v787 = vpop.f32.mrf.mxu0
    %v788 = vadd.f32 0.0, %v787
    %v789 = vpop.f32.mrf.mxu0
    %790 = vdwg.mxu0
    %791 = vmatpush.bf16.msra.mxu0 %v558
    %792 = vmatpush.bf16.msra.mxu0 %v555
    %793 = vmatpush.bf16.msra.mxu0 %v552
    %794 = vmatpush.bf16.msra.mxu0 %v549
    %795 = vmatpush.bf16.msra.mxu0 %v546
    %796 = vmatpush.bf16.msra.mxu0 %v543
    %797 = vmatpush.bf16.msra.mxu0 %v540
    %798 = vmatpush.bf16.msra.mxu0 %v537
    %799 = vmatmul.bf16.gmra.mxu0 %v777
    %v800 = vpop.f32.mrf.mxu0
    %v801 = vadd.f32 0.0, %v800
    %v802 = vpop.f32.mrf.mxu0
    %803 = vdwg.mxu0
    %804 = vmatpush.bf16.msra.mxu0 %v559
    %805 = vmatpush.bf16.msra.mxu0 %v556
    %806 = vmatpush.bf16.msra.mxu0 %v553
    %807 = vmatpush.bf16.msra.mxu0 %v550
    %808 = vmatpush.bf16.msra.mxu0 %v547
    %809 = vmatpush.bf16.msra.mxu0 %v544
    %810 = vmatpush.bf16.msra.mxu0 %v541
    %811 = vmatpush.bf16.msra.mxu0 %v538
    %812 = vmatmul.bf16.gmra.mxu0 %v777
    %v813 = vpop.f32.mrf.mxu0
    %v814 = vadd.f32 0.0, %v813
    %v815 = vpop.f32.mrf.mxu0
    %816 = vdwg.mxu0
    %v817 = vadd.f32 %v774, %v788
    %v818 = vxor.u32 %v817, 2147483648
    %v819 = vmul.f32 %v818, 1.442695
    %v820 = vpow.pop %v819
    %v821 = vadd.f32 %v820, 1.0
    %v822 = vrcp.pop %v821
    %v823 = vmul.f32 %v821, %v822
    %v824 = vsub.f32 1.0, %v823
    %v825 = vmul.f32 %v822, %v824
    %v826 = vadd.f32 %v822, %v825
    %vm827 = vweird.f32 %v821
    %vm828 = vweird.f32 %v822
    %vm829 = vmor %vm827, %vm828
    %v830 = vsel %vm829, %v822, %v826
    %v831 = vand.u32 2147483647, %v821
    %vm832 = vcmp.eq.f32.partialorder %v831, 8.507059e+37
    %v833 = vand.u32 %v821, 2147483648
    %v834 = vor.u32 1.1754944e-38, %v833
    %v835 = vsel %vm832, %v834, %v830
    %v836 = vmul.f32 1.0, %v835
    %v837 = vadd.f32 %v775, %v801
    %v838 = vxor.u32 %v837, 2147483648
    %v839 = vmul.f32 %v838, 1.442695
    %v840 = vpow.pop %v839
    %v841 = vadd.f32 %v840, 1.0
    %v842 = vrcp.pop %v841
    %v843 = vmul.f32 %v841, %v842
    %v844 = vsub.f32 1.0, %v843
    %v845 = vmul.f32 %v842, %v844
    %v846 = vadd.f32 %v842, %v845
    %vm847 = vweird.f32 %v841
    %vm848 = vweird.f32 %v842
    %vm849 = vmor %vm847, %vm848
    %v850 = vsel %vm849, %v842, %v846
    %v851 = vand.u32 2147483647, %v841
    %vm852 = vcmp.eq.f32.partialorder %v851, 8.507059e+37
    %v853 = vand.u32 %v841, 2147483648
    %v854 = vor.u32 1.1754944e-38, %v853
    %v855 = vsel %vm852, %v854, %v850
    %v856 = vmul.f32 1.0, %v855
    %v857 = vadd.f32 %v814, %v664
    %v858 = vmul.f32 %v836, %v857
    %v859 = vadd.f32 %v776, %v858
    %v860 = vtanh.pop %v859
    %v861 = vsub.f32 1.0, %v856
    %v862 = vmul.f32 %v861, %v860
    %v863 = vmul.f32 %v856, %v768
    %v864 = vadd.f32 %v862, %v863
    %s865 = scalar_lea.vmem [#allocation13], 16
    %866 = vst [vmem:[%s865] sm:$0xff] %v864
    %s867 = smul.u32 3, 3
    %s868 = smul.addr %s867, 8
    %s869 = scalar_lea.vmem [#allocation3], %s868
    %v870 = vld [vmem:[%s869] sm:$0xff]
    %v871 = vld [vmem:[%s869 + $0x8] sm:$0xff]
    %v872 = vld [vmem:[%s869 + $0x10] sm:$0xff]
    %v873 = vpack.c.bf16 %v864, %v864
    %874 = vmatpush.bf16.msra.mxu0 %v557
    %875 = vmatpush.bf16.msra.mxu0 %v554
    %876 = vmatpush.bf16.msra.mxu0 %v551
    %877 = vmatpush.bf16.msra.mxu0 %v548
    %878 = vmatpush.bf16.msra.mxu0 %v545
    %879 = vmatpush.bf16.msra.mxu0 %v542
    %880 = vmatpush.bf16.msra.mxu0 %v539
    %881 = vmatpush.bf16.msra.mxu0 %v536
    %882 = vmatmul.bf16.gmra.mxu0 %v873
    %v883 = vpop.f32.mrf.mxu0
    %v884 = vadd.f32 0.0, %v883
    %v885 = vpop.f32.mrf.mxu0
    %886 = vdwg.mxu0
    %887 = vmatpush.bf16.msra.mxu0 %v558
    %888 = vmatpush.bf16.msra.mxu0 %v555
    %889 = vmatpush.bf16.msra.mxu0 %v552
    %890 = vmatpush.bf16.msra.mxu0 %v549
    %891 = vmatpush.bf16.msra.mxu0 %v546
    %892 = vmatpush.bf16.msra.mxu0 %v543
    %893 = vmatpush.bf16.msra.mxu0 %v540
    %894 = vmatpush.bf16.msra.mxu0 %v537
    %895 = vmatmul.bf16.gmra.mxu0 %v873
    %v896 = vpop.f32.mrf.mxu0
    %v897 = vadd.f32 0.0, %v896
    %v898 = vpop.f32.mrf.mxu0
    %899 = vdwg.mxu0
    %900 = vmatpush.bf16.msra.mxu0 %v559
    %901 = vmatpush.bf16.msra.mxu0 %v556
    %902 = vmatpush.bf16.msra.mxu0 %v553
    %903 = vmatpush.bf16.msra.mxu0 %v550
    %904 = vmatpush.bf16.msra.mxu0 %v547
    %905 = vmatpush.bf16.msra.mxu0 %v544
    %906 = vmatpush.bf16.msra.mxu0 %v541
    %907 = vmatpush.bf16.msra.mxu0 %v538
    %908 = vmatmul.bf16.gmra.mxu0 %v873
    %v909 = vpop.f32.mrf.mxu0
    %v910 = vadd.f32 0.0, %v909
    %v911 = vpop.f32.mrf.mxu0
    %912 = vdwg.mxu0
    %v913 = vadd.f32 %v870, %v884
    %v914 = vxor.u32 %v913, 2147483648
    %v915 = vmul.f32 %v914, 1.442695
    %v916 = vpow.pop %v915
    %v917 = vadd.f32 %v916, 1.0
    %v918 = vrcp.pop %v917
    %v919 = vmul.f32 %v917, %v918
    %v920 = vsub.f32 1.0, %v919
    %v921 = vmul.f32 %v918, %v920
    %v922 = vadd.f32 %v918, %v921
    %vm923 = vweird.f32 %v917
    %vm924 = vweird.f32 %v918
    %vm925 = vmor %vm923, %vm924
    %v926 = vsel %vm925, %v918, %v922
    %v927 = vand.u32 2147483647, %v917
    %vm928 = vcmp.eq.f32.partialorder %v927, 8.507059e+37
    %v929 = vand.u32 %v917, 2147483648
    %v930 = vor.u32 1.1754944e-38, %v929
    %v931 = vsel %vm928, %v930, %v926
    %v932 = vmul.f32 1.0, %v931
    %v933 = vadd.f32 %v871, %v897
    %v934 = vxor.u32 %v933, 2147483648
    %v935 = vmul.f32 %v934, 1.442695
    %v936 = vpow.pop %v935
    %v937 = vadd.f32 %v936, 1.0
    %v938 = vrcp.pop %v937
    %v939 = vmul.f32 %v937, %v938
    %v940 = vsub.f32 1.0, %v939
    %v941 = vmul.f32 %v938, %v940
    %v942 = vadd.f32 %v938, %v941
    %vm943 = vweird.f32 %v937
    %vm944 = vweird.f32 %v938
    %vm945 = vmor %vm943, %vm944
    %v946 = vsel %vm945, %v938, %v942
    %v947 = vand.u32 2147483647, %v937
    %vm948 = vcmp.eq.f32.partialorder %v947, 8.507059e+37
    %v949 = vand.u32 %v937, 2147483648
    %v950 = vor.u32 1.1754944e-38, %v949
    %v951 = vsel %vm948, %v950, %v946
    %v952 = vmul.f32 1.0, %v951
    %v953 = vadd.f32 %v910, %v664
    %v954 = vmul.f32 %v932, %v953
    %v955 = vadd.f32 %v872, %v954
    %v956 = vtanh.pop %v955
    %v957 = vsub.f32 1.0, %v952
    %v958 = vmul.f32 %v957, %v956
    %v959 = vmul.f32 %v952, %v864
    %v960 = vadd.f32 %v958, %v959
    %s961 = scalar_lea.vmem [#allocation13], 24
    %962 = vst [vmem:[%s961] sm:$0xff] %v960
    %s963 = smul.u32 4, 3
    %s964 = smul.addr %s963, 8
    %s965 = scalar_lea.vmem [#allocation3], %s964
    %v966 = vld [vmem:[%s965] sm:$0xff]
    %v967 = vld [vmem:[%s965 + $0x8] sm:$0xff]
    %v968 = vld [vmem:[%s965 + $0x10] sm:$0xff]
    %v969 = vpack.c.bf16 %v960, %v960
    %970 = vmatpush.bf16.msra.mxu0 %v557
    %971 = vmatpush.bf16.msra.mxu0 %v554
    %972 = vmatpush.bf16.msra.mxu0 %v551
    %973 = vmatpush.bf16.msra.mxu0 %v548
    %974 = vmatpush.bf16.msra.mxu0 %v545
    %975 = vmatpush.bf16.msra.mxu0 %v542
    %976 = vmatpush.bf16.msra.mxu0 %v539
    %977 = vmatpush.bf16.msra.mxu0 %v536
    %978 = vmatmul.bf16.gmra.mxu0 %v969
    %v979 = vpop.f32.mrf.mxu0
    %v980 = vadd.f32 0.0, %v979
    %v981 = vpop.f32.mrf.mxu0
    %982 = vdwg.mxu0
    %983 = vmatpush.bf16.msra.mxu0 %v558
    %984 = vmatpush.bf16.msra.mxu0 %v555
    %985 = vmatpush.bf16.msra.mxu0 %v552
    %986 = vmatpush.bf16.msra.mxu0 %v549
    %987 = vmatpush.bf16.msra.mxu0 %v546
    %988 = vmatpush.bf16.msra.mxu0 %v543
    %989 = vmatpush.bf16.msra.mxu0 %v540
    %990 = vmatpush.bf16.msra.mxu0 %v537
    %991 = vmatmul.bf16.gmra.mxu0 %v969
    %v992 = vpop.f32.mrf.mxu0
    %v993 = vadd.f32 0.0, %v992
    %v994 = vpop.f32.mrf.mxu0
    %995 = vdwg.mxu0
    %996 = vmatpush.bf16.msra.mxu0 %v559
    %997 = vmatpush.bf16.msra.mxu0 %v556
    %998 = vmatpush.bf16.msra.mxu0 %v553
    %999 = vmatpush.bf16.msra.mxu0 %v550
    %1000 = vmatpush.bf16.msra.mxu0 %v547
    %1001 = vmatpush.bf16.msra.mxu0 %v544
    %1002 = vmatpush.bf16.msra.mxu0 %v541
    %1003 = vmatpush.bf16.msra.mxu0 %v538
    %1004 = vmatmul.bf16.gmra.mxu0 %v969
    %v1005 = vpop.f32.mrf.mxu0
    %v1006 = vadd.f32 0.0, %v1005
    %v1007 = vpop.f32.mrf.mxu0
    %1008 = vdwg.mxu0
    %v1009 = vadd.f32 %v966, %v980
    %v1010 = vxor.u32 %v1009, 2147483648
    %v1011 = vmul.f32 %v1010, 1.442695
    %v1012 = vpow.pop %v1011
    %v1013 = vadd.f32 %v1012, 1.0
    %v1014 = vrcp.pop %v1013
    %v1015 = vmul.f32 %v1013, %v1014
    %v1016 = vsub.f32 1.0, %v1015
    %v1017 = vmul.f32 %v1014, %v1016
    %v1018 = vadd.f32 %v1014, %v1017
    %vm1019 = vweird.f32 %v1013
    %vm1020 = vweird.f32 %v1014
    %vm1021 = vmor %vm1019, %vm1020
    %v1022 = vsel %vm1021, %v1014, %v1018
    %v1023 = vand.u32 2147483647, %v1013
    %vm1024 = vcmp.eq.f32.partialorder %v1023, 8.507059e+37
    %v1025 = vand.u32 %v1013, 2147483648
    %v1026 = vor.u32 1.1754944e-38, %v1025
    %v1027 = vsel %vm1024, %v1026, %v1022
    %v1028 = vmul.f32 1.0, %v1027
    %v1029 = vadd.f32 %v967, %v993
    %v1030 = vxor.u32 %v1029, 2147483648
    %v1031 = vmul.f32 %v1030, 1.442695
    %v1032 = vpow.pop %v1031
    %v1033 = vadd.f32 %v1032, 1.0
    %v1034 = vrcp.pop %v1033
    %v1035 = vmul.f32 %v1033, %v1034
    %v1036 = vsub.f32 1.0, %v1035
    %v1037 = vmul.f32 %v1034, %v1036
    %v1038 = vadd.f32 %v1034, %v1037
    %vm1039 = vweird.f32 %v1033
    %vm1040 = vweird.f32 %v1034
    %vm1041 = vmor %vm1039, %vm1040
    %v1042 = vsel %vm1041, %v1034, %v1038
    %v1043 = vand.u32 2147483647, %v1033
    %vm1044 = vcmp.eq.f32.partialorder %v1043, 8.507059e+37
    %v1045 = vand.u32 %v1033, 2147483648
    %v1046 = vor.u32 1.1754944e-38, %v1045
    %v1047 = vsel %vm1044, %v1046, %v1042
    %v1048 = vmul.f32 1.0, %v1047
    %v1049 = vadd.f32 %v1006, %v664
    %v1050 = vmul.f32 %v1028, %v1049
    %v1051 = vadd.f32 %v968, %v1050
    %v1052 = vtanh.pop %v1051
    %v1053 = vsub.f32 1.0, %v1048
    %v1054 = vmul.f32 %v1053, %v1052
    %v1055 = vmul.f32 %v1048, %v960
    %v1056 = vadd.f32 %v1054, %v1055
    %s1057 = scalar_lea.vmem [#allocation13], 32
    %1058 = vst [vmem:[%s1057] sm:$0xff] %v1056
    %s1059 = smul.u32 5, 3
    %s1060 = smul.addr %s1059, 8
    %s1061 = scalar_lea.vmem [#allocation3], %s1060
    %v1062 = vld [vmem:[%s1061] sm:$0xff]
    %v1063 = vld [vmem:[%s1061 + $0x8] sm:$0xff]
    %v1064 = vld [vmem:[%s1061 + $0x10] sm:$0xff]
    %v1065 = vpack.c.bf16 %v1056, %v1056
    %1066 = vmatpush.bf16.msra.mxu0 %v557
    %1067 = vmatpush.bf16.msra.mxu0 %v554
    %1068 = vmatpush.bf16.msra.mxu0 %v551
    %1069 = vmatpush.bf16.msra.mxu0 %v548
    %1070 = vmatpush.bf16.msra.mxu0 %v545
    %1071 = vmatpush.bf16.msra.mxu0 %v542
    %1072 = vmatpush.bf16.msra.mxu0 %v539
    %1073 = vmatpush.bf16.msra.mxu0 %v536
    %1074 = vmatmul.bf16.gmra.mxu0 %v1065
    %v1075 = vpop.f32.mrf.mxu0
    %v1076 = vadd.f32 0.0, %v1075
    %v1077 = vpop.f32.mrf.mxu0
    %1078 = vdwg.mxu0
    %1079 = vmatpush.bf16.msra.mxu0 %v558
    %1080 = vmatpush.bf16.msra.mxu0 %v555
    %1081 = vmatpush.bf16.msra.mxu0 %v552
    %1082 = vmatpush.bf16.msra.mxu0 %v549
    %1083 = vmatpush.bf16.msra.mxu0 %v546
    %1084 = vmatpush.bf16.msra.mxu0 %v543
    %1085 = vmatpush.bf16.msra.mxu0 %v540
    %1086 = vmatpush.bf16.msra.mxu0 %v537
    %1087 = vmatmul.bf16.gmra.mxu0 %v1065
    %v1088 = vpop.f32.mrf.mxu0
    %v1089 = vadd.f32 0.0, %v1088
    %v1090 = vpop.f32.mrf.mxu0
    %1091 = vdwg.mxu0
    %1092 = vmatpush.bf16.msra.mxu0 %v559
    %1093 = vmatpush.bf16.msra.mxu0 %v556
    %1094 = vmatpush.bf16.msra.mxu0 %v553
    %1095 = vmatpush.bf16.msra.mxu0 %v550
    %1096 = vmatpush.bf16.msra.mxu0 %v547
    %1097 = vmatpush.bf16.msra.mxu0 %v544
    %1098 = vmatpush.bf16.msra.mxu0 %v541
    %1099 = vmatpush.bf16.msra.mxu0 %v538
    %1100 = vmatmul.bf16.gmra.mxu0 %v1065
    %v1101 = vpop.f32.mrf.mxu0
    %v1102 = vadd.f32 0.0, %v1101
    %v1103 = vpop.f32.mrf.mxu0
    %1104 = vdwg.mxu0
    %v1105 = vadd.f32 %v1062, %v1076
    %v1106 = vxor.u32 %v1105, 2147483648
    %v1107 = vmul.f32 %v1106, 1.442695
    %v1108 = vpow.pop %v1107
    %v1109 = vadd.f32 %v1108, 1.0
    %v1110 = vrcp.pop %v1109
    %v1111 = vmul.f32 %v1109, %v1110
    %v1112 = vsub.f32 1.0, %v1111
    %v1113 = vmul.f32 %v1110, %v1112
    %v1114 = vadd.f32 %v1110, %v1113
    %vm1115 = vweird.f32 %v1109
    %vm1116 = vweird.f32 %v1110
    %vm1117 = vmor %vm1115, %vm1116
    %v1118 = vsel %vm1117, %v1110, %v1114
    %v1119 = vand.u32 2147483647, %v1109
    %vm1120 = vcmp.eq.f32.partialorder %v1119, 8.507059e+37
    %v1121 = vand.u32 %v1109, 2147483648
    %v1122 = vor.u32 1.1754944e-38, %v1121
    %v1123 = vsel %vm1120, %v1122, %v1118
    %v1124 = vmul.f32 1.0, %v1123
    %v1125 = vadd.f32 %v1063, %v1089
    %v1126 = vxor.u32 %v1125, 2147483648
    %v1127 = vmul.f32 %v1126, 1.442695
    %v1128 = vpow.pop %v1127
    %v1129 = vadd.f32 %v1128, 1.0
    %v1130 = vrcp.pop %v1129
    %v1131 = vmul.f32 %v1129, %v1130
    %v1132 = vsub.f32 1.0, %v1131
    %v1133 = vmul.f32 %v1130, %v1132
    %v1134 = vadd.f32 %v1130, %v1133
    %vm1135 = vweird.f32 %v1129
    %vm1136 = vweird.f32 %v1130
    %vm1137 = vmor %vm1135, %vm1136
    %v1138 = vsel %vm1137, %v1130, %v1134
    %v1139 = vand.u32 2147483647, %v1129
    %vm1140 = vcmp.eq.f32.partialorder %v1139, 8.507059e+37
    %v1141 = vand.u32 %v1129, 2147483648
    %v1142 = vor.u32 1.1754944e-38, %v1141
    %v1143 = vsel %vm1140, %v1142, %v1138
    %v1144 = vmul.f32 1.0, %v1143
    %v1145 = vadd.f32 %v1102, %v664
    %v1146 = vmul.f32 %v1124, %v1145
    %v1147 = vadd.f32 %v1064, %v1146
    %v1148 = vtanh.pop %v1147
    %v1149 = vsub.f32 1.0, %v1144
    %v1150 = vmul.f32 %v1149, %v1148
    %v1151 = vmul.f32 %v1144, %v1056
    %v1152 = vadd.f32 %v1150, %v1151
    %s1153 = scalar_lea.vmem [#allocation13], 40
    %1154 = vst [vmem:[%s1153] sm:$0xff] %v1152
    %s1155 = smul.u32 6, 3
    %s1156 = smul.addr %s1155, 8
    %s1157 = scalar_lea.vmem [#allocation3], %s1156
    %v1158 = vld [vmem:[%s1157] sm:$0xff]
    %v1159 = vld [vmem:[%s1157 + $0x8] sm:$0xff]
    %v1160 = vld [vmem:[%s1157 + $0x10] sm:$0xff]
    %v1161 = vpack.c.bf16 %v1152, %v1152
    %1162 = vmatpush.bf16.msra.mxu0 %v557
    %1163 = vmatpush.bf16.msra.mxu0 %v554
    %1164 = vmatpush.bf16.msra.mxu0 %v551
    %1165 = vmatpush.bf16.msra.mxu0 %v548
    %1166 = vmatpush.bf16.msra.mxu0 %v545
    %1167 = vmatpush.bf16.msra.mxu0 %v542
    %1168 = vmatpush.bf16.msra.mxu0 %v539
    %1169 = vmatpush.bf16.msra.mxu0 %v536
    %1170 = vmatmul.bf16.gmra.mxu0 %v1161
    %v1171 = vpop.f32.mrf.mxu0
    %v1172 = vadd.f32 0.0, %v1171
    %v1173 = vpop.f32.mrf.mxu0
    %1174 = vdwg.mxu0
    %1175 = vmatpush.bf16.msra.mxu0 %v558
    %1176 = vmatpush.bf16.msra.mxu0 %v555
    %1177 = vmatpush.bf16.msra.mxu0 %v552
    %1178 = vmatpush.bf16.msra.mxu0 %v549
    %1179 = vmatpush.bf16.msra.mxu0 %v546
    %1180 = vmatpush.bf16.msra.mxu0 %v543
    %1181 = vmatpush.bf16.msra.mxu0 %v540
    %1182 = vmatpush.bf16.msra.mxu0 %v537
    %1183 = vmatmul.bf16.gmra.mxu0 %v1161
    %v1184 = vpop.f32.mrf.mxu0
    %v1185 = vadd.f32 0.0, %v1184
    %v1186 = vpop.f32.mrf.mxu0
    %1187 = vdwg.mxu0
    %1188 = vmatpush.bf16.msra.mxu0 %v559
    %1189 = vmatpush.bf16.msra.mxu0 %v556
    %1190 = vmatpush.bf16.msra.mxu0 %v553
    %1191 = vmatpush.bf16.msra.mxu0 %v550
    %1192 = vmatpush.bf16.msra.mxu0 %v547
    %1193 = vmatpush.bf16.msra.mxu0 %v544
    %1194 = vmatpush.bf16.msra.mxu0 %v541
    %1195 = vmatpush.bf16.msra.mxu0 %v538
    %1196 = vmatmul.bf16.gmra.mxu0 %v1161
    %v1197 = vpop.f32.mrf.mxu0
    %v1198 = vadd.f32 0.0, %v1197
    %v1199 = vpop.f32.mrf.mxu0
    %1200 = vdwg.mxu0
    %v1201 = vadd.f32 %v1158, %v1172
    %v1202 = vxor.u32 %v1201, 2147483648
    %v1203 = vmul.f32 %v1202, 1.442695
    %v1204 = vpow.pop %v1203
    %v1205 = vadd.f32 %v1204, 1.0
    %v1206 = vrcp.pop %v1205
    %v1207 = vmul.f32 %v1205, %v1206
    %v1208 = vsub.f32 1.0, %v1207
    %v1209 = vmul.f32 %v1206, %v1208
    %v1210 = vadd.f32 %v1206, %v1209
    %vm1211 = vweird.f32 %v1205
    %vm1212 = vweird.f32 %v1206
    %vm1213 = vmor %vm1211, %vm1212
    %v1214 = vsel %vm1213, %v1206, %v1210
    %v1215 = vand.u32 2147483647, %v1205
    %vm1216 = vcmp.eq.f32.partialorder %v1215, 8.507059e+37
    %v1217 = vand.u32 %v1205, 2147483648
    %v1218 = vor.u32 1.1754944e-38, %v1217
    %v1219 = vsel %vm1216, %v1218, %v1214
    %v1220 = vmul.f32 1.0, %v1219
    %v1221 = vadd.f32 %v1159, %v1185
    %v1222 = vxor.u32 %v1221, 2147483648
    %v1223 = vmul.f32 %v1222, 1.442695
    %v1224 = vpow.pop %v1223
    %v1225 = vadd.f32 %v1224, 1.0
    %v1226 = vrcp.pop %v1225
    %v1227 = vmul.f32 %v1225, %v1226
    %v1228 = vsub.f32 1.0, %v1227
    %v1229 = vmul.f32 %v1226, %v1228
    %v1230 = vadd.f32 %v1226, %v1229
    %vm1231 = vweird.f32 %v1225
    %vm1232 = vweird.f32 %v1226
    %vm1233 = vmor %vm1231, %vm1232
    %v1234 = vsel %vm1233, %v1226, %v1230
    %v1235 = vand.u32 2147483647, %v1225
    %vm1236 = vcmp.eq.f32.partialorder %v1235, 8.507059e+37
    %v1237 = vand.u32 %v1225, 2147483648
    %v1238 = vor.u32 1.1754944e-38, %v1237
    %v1239 = vsel %vm1236, %v1238, %v1234
    %v1240 = vmul.f32 1.0, %v1239
    %v1241 = vadd.f32 %v1198, %v664
    %v1242 = vmul.f32 %v1220, %v1241
    %v1243 = vadd.f32 %v1160, %v1242
    %v1244 = vtanh.pop %v1243
    %v1245 = vsub.f32 1.0, %v1240
    %v1246 = vmul.f32 %v1245, %v1244
    %v1247 = vmul.f32 %v1240, %v1152
    %v1248 = vadd.f32 %v1246, %v1247
    %s1249 = scalar_lea.vmem [#allocation13], 48
    %1250 = vst [vmem:[%s1249] sm:$0xff] %v1248
    %s1251 = smul.u32 7, 3
    %s1252 = smul.addr %s1251, 8
    %s1253 = scalar_lea.vmem [#allocation3], %s1252
    %v1254 = vld [vmem:[%s1253] sm:$0xff]
    %v1255 = vld [vmem:[%s1253 + $0x8] sm:$0xff]
    %v1256 = vld [vmem:[%s1253 + $0x10] sm:$0xff]
    %v1257 = vpack.c.bf16 %v1248, %v1248
    %1258 = vmatpush.bf16.msra.mxu0 %v557
    %1259 = vmatpush.bf16.msra.mxu0 %v554
    %1260 = vmatpush.bf16.msra.mxu0 %v551
    %1261 = vmatpush.bf16.msra.mxu0 %v548
    %1262 = vmatpush.bf16.msra.mxu0 %v545
    %1263 = vmatpush.bf16.msra.mxu0 %v542
    %1264 = vmatpush.bf16.msra.mxu0 %v539
    %1265 = vmatpush.bf16.msra.mxu0 %v536
    %1266 = vmatmul.bf16.gmra.mxu0 %v1257
    %v1267 = vpop.f32.mrf.mxu0
    %v1268 = vadd.f32 0.0, %v1267
    %v1269 = vpop.f32.mrf.mxu0
    %1270 = vdwg.mxu0
    %1271 = vmatpush.bf16.msra.mxu0 %v558
    %1272 = vmatpush.bf16.msra.mxu0 %v555
    %1273 = vmatpush.bf16.msra.mxu0 %v552
    %1274 = vmatpush.bf16.msra.mxu0 %v549
    %1275 = vmatpush.bf16.msra.mxu0 %v546
    %1276 = vmatpush.bf16.msra.mxu0 %v543
    %1277 = vmatpush.bf16.msra.mxu0 %v540
    %1278 = vmatpush.bf16.msra.mxu0 %v537
    %1279 = vmatmul.bf16.gmra.mxu0 %v1257
    %v1280 = vpop.f32.mrf.mxu0
    %v1281 = vadd.f32 0.0, %v1280
    %v1282 = vpop.f32.mrf.mxu0
    %1283 = vdwg.mxu0
    %1284 = vmatpush.bf16.msra.mxu0 %v559
    %1285 = vmatpush.bf16.msra.mxu0 %v556
    %1286 = vmatpush.bf16.msra.mxu0 %v553
    %1287 = vmatpush.bf16.msra.mxu0 %v550
    %1288 = vmatpush.bf16.msra.mxu0 %v547
    %1289 = vmatpush.bf16.msra.mxu0 %v544
    %1290 = vmatpush.bf16.msra.mxu0 %v541
    %1291 = vmatpush.bf16.msra.mxu0 %v538
    %1292 = vmatmul.bf16.gmra.mxu0 %v1257
    %v1293 = vpop.f32.mrf.mxu0
    %v1294 = vadd.f32 0.0, %v1293
    %v1295 = vpop.f32.mrf.mxu0
    %1296 = vdwg.mxu0
    %v1297 = vadd.f32 %v1254, %v1268
    %v1298 = vxor.u32 %v1297, 2147483648
    %v1299 = vmul.f32 %v1298, 1.442695
    %v1300 = vpow.pop %v1299
    %v1301 = vadd.f32 %v1300, 1.0
    %v1302 = vrcp.pop %v1301
    %v1303 = vmul.f32 %v1301, %v1302
    %v1304 = vsub.f32 1.0, %v1303
    %v1305 = vmul.f32 %v1302, %v1304
    %v1306 = vadd.f32 %v1302, %v1305
    %vm1307 = vweird.f32 %v1301
    %vm1308 = vweird.f32 %v1302
    %vm1309 = vmor %vm1307, %vm1308
    %v1310 = vsel %vm1309, %v1302, %v1306
    %v1311 = vand.u32 2147483647, %v1301
    %vm1312 = vcmp.eq.f32.partialorder %v1311, 8.507059e+37
    %v1313 = vand.u32 %v1301, 2147483648
    %v1314 = vor.u32 1.1754944e-38, %v1313
    %v1315 = vsel %vm1312, %v1314, %v1310
    %v1316 = vmul.f32 1.0, %v1315
    %v1317 = vadd.f32 %v1255, %v1281
    %v1318 = vxor.u32 %v1317, 2147483648
    %v1319 = vmul.f32 %v1318, 1.442695
    %v1320 = vpow.pop %v1319
    %v1321 = vadd.f32 %v1320, 1.0
    %v1322 = vrcp.pop %v1321
    %v1323 = vmul.f32 %v1321, %v1322
    %v1324 = vsub.f32 1.0, %v1323
    %v1325 = vmul.f32 %v1322, %v1324
    %v1326 = vadd.f32 %v1322, %v1325
    %vm1327 = vweird.f32 %v1321
    %vm1328 = vweird.f32 %v1322
    %vm1329 = vmor %vm1327, %vm1328
    %v1330 = vsel %vm1329, %v1322, %v1326
    %v1331 = vand.u32 2147483647, %v1321
    %vm1332 = vcmp.eq.f32.partialorder %v1331, 8.507059e+37
    %v1333 = vand.u32 %v1321, 2147483648
    %v1334 = vor.u32 1.1754944e-38, %v1333
    %v1335 = vsel %vm1332, %v1334, %v1330
    %v1336 = vmul.f32 1.0, %v1335
    %v1337 = vadd.f32 %v1294, %v664
    %v1338 = vmul.f32 %v1316, %v1337
    %v1339 = vadd.f32 %v1256, %v1338
    %v1340 = vtanh.pop %v1339
    %v1341 = vsub.f32 1.0, %v1336
    %v1342 = vmul.f32 %v1341, %v1340
    %v1343 = vmul.f32 %v1336, %v1248
    %v1344 = vadd.f32 %v1342, %v1343
    %s1345 = scalar_lea.vmem [#allocation13], 56
    %1346 = vst [vmem:[%s1345] sm:$0xff] %v1344
    %1347 = vst [vmem:[#allocation2] sm:$0xff] %v1344
    // Predicated region
    $region50: #{tpu_custom_call.1} parent=1 // pred_check
      _
    $region51: #{tpu_custom_call.1} parent=1 // pred_check_branch
      %1349 = sbr.rel (0) target = $region53
    $region52: #{tpu_custom_call.1} parent=1 // pred_region
      %1351 = vsyncadd [#allocation6], 0
      %s1352 = sshll.u32 [#allocation13], 4
      %s1353 = int_to_ptr.vmem [resolvable:$true] %s1352
      %s1354 = sshll.u32 %s6, 4
      %s1355 = int_to_ptr.hbm [resolvable:$true] %s1354
      %1360 = dma.vmem_to_hbm [thread:$0]  %s1353, 1024, %s1355, [#allocation6], 128, 128, 8
    $region53: #{tpu_custom_call.1} parent=1 // pred_fallthru
      _
    // Predicated region
    $region54: #{tpu_custom_call.1} parent=1 // pred_check
      _
    $region55: #{tpu_custom_call.1} parent=1 // pred_check_branch
      %1362 = sbr.rel (0) target = $region57
    $region56: #{tpu_custom_call.1} parent=1 // pred_region
      %1364 = dma.done [#allocation6], 1024
    $region57: #{tpu_custom_call.1} parent=1 // pred_fallthru
      _
    %1365 = vsyncpa [#allocation5], 1
    %1366 = vsyncpa [#allocation8], 1
    %1367 = vsyncpa [#allocation11], 1
    %1368 = vsyncpa [#allocation6], 1

</llo_original>
